<compile_context>
chip_gen: v7x
topology: tpu7x:2x2x1
jax: 0.10.0
libtpu: 0.0.40
codegen_flags: <defaults>
</compile_context>

<pallas_src>
import functools

import jax
import jax.numpy as jnp
from jax.experimental import pallas as pl
from jax.experimental.pallas import tpu as pltpu


# Tile-size preferences (128-aligned for the MXU / (8,128) vreg layout).
TOKEN_TILE = 256      # token (M) tiles
QKV_N_TILE = 256      # c_attn output tile: multiple of head_dim, divides H
MLP_N_TILE = 256      # intermediate tile (per gate half)
MM_N_TILE = 256       # projection matmul N tile
MM_K_TILE = 256       # projection matmul K tile
ATTN_TILE = 256       # flash-attention q and kv tile (kept equal)
VOCAB_TILE = 512      # lm_head vocab tile

NEG_INF = -1e30       # large finite negative; avoids exp(-inf - -inf) NaNs
VMEM_LIMIT = 48 * 1024 * 1024


def _tiles(dim, pref):
    t = min(dim, pref)
    assert dim % t == 0, f"dim {dim} not divisible by tile {t}"
    return t, dim // t


# ----------------------------------------------------------------- kernels


def _norm_qkv_rope_kernel(x_ref, lnw_ref, w_ref, b_ref, cos_ref, sin_ref,
                          qkv_ref, xn_ref, *, eps, hidden_size, head_dim,
                          out_tile):
    """RMSNorm (once per token tile) -> c_attn tile matmul + bias -> RoPE(Q,K).

    Grid = (token tile i, 3H output tile j).  out_tile divides hidden_size and is
    a multiple of head_dim, so every output tile lies entirely inside the Q, K or
    V third of the c_attn output and bias/RoPE apply cleanly per tile.
    """
    j = pl.program_id(1)

    @pl.when(j == 0)
    def _():
        x = x_ref[...].astype(jnp.float32)
        var = jnp.mean(x * x, axis=-1, keepdims=True)
        xn = (x * jax.lax.rsqrt(var + eps)) * lnw_ref[...]
        xn_ref[...] = xn.astype(xn_ref.dtype)

    out = jnp.dot(xn_ref[...], w_ref[...], preferred_element_type=jnp.float32)
    out = out + b_ref[...].astype(jnp.float32)                  # (tm, out_tile)

    half = head_dim // 2
    n_sub = out_tile // head_dim
    cos = cos_ref[...]              # (tm, Dh) f32
    sin = sin_ref[...]              # (tm, Dh) f32, sign folded: [-sin, sin]

    def rope(t):
        # rotate_half(x)*[sin,sin] == concat([x2, x1])*[-sin, sin]
        pieces = []
        for s in range(n_sub):
            xb = t[:, s * head_dim:(s + 1) * head_dim]
            rot = jnp.concatenate([xb[:, half:], xb[:, :half]], axis=-1)
            pieces.append(xb * cos + rot * sin)
        return pieces[0] if n_sub == 1 else jnp.concatenate(pieces, axis=-1)

    col0 = j * out_tile

    @pl.when(col0 < 2 * hidden_size)          # Q or K tile: apply RoPE
    def _():
        qkv_ref[...] = rope(out).astype(qkv_ref.dtype)

    @pl.when(col0 >= 2 * hidden_size)         # V tile: passthrough
    def _():
        qkv_ref[...] = out.astype(qkv_ref.dtype)


def _flash_attn_kernel(q_ref, k_ref, v_ref, o_ref, m_ref, l_ref, acc_ref):
    """Online-softmax causal attention. Grid = (head, q_tile, kv_tile).

    Q was pre-scaled by 1/sqrt(Dh) (folded into the c_attn Q weights).  The
    causal mask is only materialized on diagonal tiles; strictly-below-diagonal
    tiles skip the iota/compare/select, and above-diagonal tiles run nothing
    (their K/V DMA is also clamped away by the index_map in the wrapper).
    """
    qi = pl.program_id(1)
    ki = pl.program_id(2)
    nk = pl.num_programs(2)
    tq = q_ref.shape[0]
    tk = k_ref.shape[0]

    @pl.when(ki == 0)
    def _():
        m_ref[...] = jnp.full(m_ref.shape, NEG_INF, jnp.float32)
        l_ref[...] = jnp.zeros(l_ref.shape, jnp.float32)
        acc_ref[...] = jnp.zeros(acc_ref.shape, jnp.float32)

    def scores():
        return jax.lax.dot_general(
            q_ref[...], k_ref[...], (((1,), (1,)), ((), ())),
            preferred_element_type=jnp.float32)                  # (tq, tk)

    def update(s):
        m_prev = m_ref[...]
        m_new = jnp.maximum(m_prev, jnp.max(s, axis=-1, keepdims=True))
        alpha = jnp.exp(m_prev - m_new)
        p = jnp.exp(s - m_new)
        l_ref[...] = alpha * l_ref[...] + jnp.sum(p, axis=-1, keepdims=True)
        acc_ref[...] = alpha * acc_ref[...] + jnp.dot(
            p.astype(v_ref.dtype), v_ref[...],
            preferred_element_type=jnp.float32)
        m_ref[...] = m_new

    @pl.when(ki < qi)            # interior tile: fully unmasked
    def _():
        update(scores())

    @pl.when(ki == qi)           # diagonal tile: tile-local causal mask
    def _():
        s = scores()
        row = jax.lax.broadcasted_iota(jnp.int32, (tq, tk), 0)
        col = jax.lax.broadcasted_iota(jnp.int32, (tq, tk), 1)
        update(jnp.where(col <= row, s, NEG_INF))

    @pl.when(ki == nk - 1)
    def _():
        o_ref[...] = (acc_ref[...] / l_ref[...]).astype(o_ref.dtype)


def _matmul_residual_kernel(x_ref, w_ref, r_ref, o_ref, acc_ref):
    """Tiled x @ w + residual with f32 accumulator. Grid = (M, N, K)."""
    k = pl.program_id(2)

    @pl.when(k == 0)
    def _():
        acc_ref[...] = jnp.zeros(acc_ref.shape, jnp.float32)

    acc_ref[...] += jnp.dot(x_ref[...], w_ref[...],
                            preferred_element_type=jnp.float32)

    @pl.when(k == pl.num_programs(2) - 1)
    def _():
        o_ref[...] = (acc_ref[...] + r_ref[...].astype(jnp.float32)
                      ).astype(o_ref.dtype)


def _norm_mlp_gate_kernel(x_ref, lnw_ref, w12_ref, o_ref, xn_ref, *, eps, tn):
    """RMSNorm (once per token tile) -> single (H, 2*tn) matmul -> SwiGLU gate.

    Grid = (token tile i, intermediate tile j). w12 holds interleaved per-block
    [w1_blk | w2_blk] columns so one matmul produces both gate halves.
    """
    j = pl.program_id(1)

    @pl.when(j == 0)
    def _():
        x = x_ref[...].astype(jnp.float32)
        var = jnp.mean(x * x, axis=-1, keepdims=True)
        xn_ref[...] = ((x * jax.lax.rsqrt(var + eps)) * lnw_ref[...]
                       ).astype(xn_ref.dtype)

    a12 = jnp.dot(xn_ref[...], w12_ref[...],
                  preferred_element_type=jnp.float32)            # (tm, 2*tn)
    a1 = a12[:, :tn]
    a2 = a12[:, tn:]
    o_ref[...] = (a1 * (a2 * jax.nn.sigmoid(a2))).astype(o_ref.dtype)


def _norm_lm_head_kernel(x_ref, lnw_ref, w_ref, o_ref, xn_ref, *, eps):
    """ln_f (once) -> lm_head logits for the last token only. Grid = (vocab tile,)."""
    j = pl.program_id(0)

    @pl.when(j == 0)
    def _():
        x = x_ref[...].astype(jnp.float32)                       # (1, H)
        var = jnp.mean(x * x, axis=-1, keepdims=True)
        xn_ref[...] = ((x * jax.lax.rsqrt(var + eps)) * lnw_ref[...]
                       ).astype(xn_ref.dtype)

    o_ref[...] = jnp.dot(xn_ref[...], w_ref[...],
                         preferred_element_type=jnp.float32)


# ----------------------------------------------------------------- wrappers


def fused_norm_qkv_rope(x, ln_w, w, b, cos, sin, num_heads, head_dim, eps):
    S, H = x.shape
    O3 = w.shape[1]                                              # 3H
    tm, nm = _tiles(S, TOKEN_TILE)
    tn = min(QKV_N_TILE, H)
    assert H % tn == 0 and tn % head_dim == 0
    nj = O3 // tn
    kernel = functools.partial(_norm_qkv_rope_kernel, eps=eps, hidden_size=H,
                               head_dim=head_dim, out_tile=tn)
    return pl.pallas_call(
        kernel,
        grid=(nm, nj),
        in_specs=[
            pl.BlockSpec((tm, H), lambda i, j: (i, 0)),
            pl.BlockSpec((1, H), lambda i, j: (0, 0)),
            pl.BlockSpec((H, tn), lambda i, j: (0, j)),
            pl.BlockSpec((1, tn), lambda i, j: (0, j)),
            pl.BlockSpec((tm, head_dim), lambda i, j: (i, 0)),
            pl.BlockSpec((tm, head_dim), lambda i, j: (i, 0)),
        ],
        out_specs=pl.BlockSpec((tm, tn), lambda i, j: (i, j)),
        out_shape=jax.ShapeDtypeStruct((S, O3), jnp.bfloat16),
        scratch_shapes=[pltpu.VMEM((tm, H), jnp.bfloat16)],      # cached RMSNorm(x)
        compiler_params=pltpu.CompilerParams(
            dimension_semantics=("parallel", "arbitrary"),
            vmem_limit_bytes=VMEM_LIMIT),
    )(x, ln_w, w, b, cos, sin)


def flash_attention(qkv, num_heads, head_dim, seq_len):
    """qkv is (S, 3H) in [Q | K | V] head-column layout; Q pre-scaled."""
    S = seq_len
    t, nt = _tiles(S, ATTN_TILE)
    NH = num_heads

    # Clamp K/V row block to the causal bound: above-diagonal steps alias the
    # previously fetched block, so the pipeline issues no new DMA for them.
    def q_map(h, qi, ki):
        return (qi, h)

    def k_map(h, qi, ki):
        return (jnp.minimum(ki, qi), NH + h)

    def v_map(h, qi, ki):
        return (jnp.minimum(ki, qi), 2 * NH + h)

    return pl.pallas_call(
        _flash_attn_kernel,
        grid=(NH, nt, nt),
        in_specs=[
            pl.BlockSpec((t, head_dim), q_map),
            pl.BlockSpec((t, head_dim), k_map),
            pl.BlockSpec((t, head_dim), v_map),
        ],
        out_specs=pl.BlockSpec((t, head_dim), lambda h, qi, ki: (qi, h)),
        out_shape=jax.ShapeDtypeStruct((S, NH * head_dim), jnp.bfloat16),
        scratch_shapes=[
            pltpu.VMEM((t, 1), jnp.float32),        # running max m
            pltpu.VMEM((t, 1), jnp.float32),        # running sum l
            pltpu.VMEM((t, head_dim), jnp.float32),  # accumulator
        ],
        compiler_params=pltpu.CompilerParams(
            dimension_semantics=("parallel", "parallel", "arbitrary"),
            vmem_limit_bytes=VMEM_LIMIT),
    )(qkv, qkv, qkv)


def matmul_residual(x, w, residual):
    M, K = x.shape
    N = w.shape[1]
    tm, nm = _tiles(M, TOKEN_TILE)
    tn, nn_ = _tiles(N, MM_N_TILE)
    tk, nk = _tiles(K, MM_K_TILE)
    return pl.pallas_call(
        _matmul_residual_kernel,
        grid=(nm, nn_, nk),
        in_specs=[
            pl.BlockSpec((tm, tk), lambda i, j, k: (i, k)),
            pl.BlockSpec((tk, tn), lambda i, j, k: (k, j)),
            pl.BlockSpec((tm, tn), lambda i, j, k: (i, j)),
        ],
        out_specs=pl.BlockSpec((tm, tn), lambda i, j, k: (i, j)),
        out_shape=jax.ShapeDtypeStruct((M, N), jnp.bfloat16),
        scratch_shapes=[pltpu.VMEM((tm, tn), jnp.float32)],
        compiler_params=pltpu.CompilerParams(
            dimension_semantics=("parallel", "parallel", "arbitrary"),
            vmem_limit_bytes=VMEM_LIMIT),
    )(x, w, residual)


def fused_norm_mlp_gate(x, ln_w, w12, eps):
    S, H = x.shape
    I = w12.shape[1] // 2
    tm, nm = _tiles(S, TOKEN_TILE)
    tn, nj = _tiles(I, MLP_N_TILE)
    kernel = functools.partial(_norm_mlp_gate_kernel, eps=eps, tn=tn)
    return pl.pallas_call(
        kernel,
        grid=(nm, nj),
        in_specs=[
            pl.BlockSpec((tm, H), lambda i, j: (i, 0)),
            pl.BlockSpec((1, H), lambda i, j: (0, 0)),
            pl.BlockSpec((H, 2 * tn), lambda i, j: (0, j)),
        ],
        out_specs=pl.BlockSpec((tm, tn), lambda i, j: (i, j)),
        out_shape=jax.ShapeDtypeStruct((S, I), jnp.bfloat16),
        scratch_shapes=[pltpu.VMEM((tm, H), jnp.bfloat16)],      # cached RMSNorm(x)
        compiler_params=pltpu.CompilerParams(
            dimension_semantics=("parallel", "arbitrary"),
            vmem_limit_bytes=VMEM_LIMIT),
    )(x, ln_w, w12)


def norm_lm_head_last(h_last, ln_w, w, eps):
    _, H = h_last.shape
    V = w.shape[1]
    tn, nj = _tiles(V, VOCAB_TILE)
    kernel = functools.partial(_norm_lm_head_kernel, eps=eps)
    return pl.pallas_call(
        kernel,
        grid=(nj,),
        in_specs=[
            pl.BlockSpec((1, H), lambda j: (0, 0)),
            pl.BlockSpec((1, H), lambda j: (0, 0)),
            pl.BlockSpec((H, tn), lambda j: (0, j)),
        ],
        out_specs=pl.BlockSpec((1, tn), lambda j: (0, j)),
        out_shape=jax.ShapeDtypeStruct((1, V), jnp.float32),
        scratch_shapes=[pltpu.VMEM((1, H), jnp.bfloat16)],       # cached ln_f(x)
        compiler_params=pltpu.CompilerParams(
            dimension_semantics=("arbitrary",),
            vmem_limit_bytes=VMEM_LIMIT),
    )(h_last, ln_w, w)


# ----------------------------------------------------------------- model


class Config:
    vocab_size = 512
    hidden_size = 256
    num_attention_heads = 2          # head_dim = 128 (lane-aligned)
    intermediate_size = 512          # QWenMLP uses intermediate_size // 2
    num_hidden_layers = 2
    max_position_embeddings = 256
    layer_norm_epsilon = 1e-6
    rope_theta = 10000.0


def init_params(cfg, key):
    H = cfg.hidden_size
    I = cfg.intermediate_size // 2
    NH = cfg.num_attention_heads
    Dh = H // NH
    scale = Dh ** -0.5
    tn_mlp, nj_mlp = _tiles(I, MLP_N_TILE)

    def nrm(k, shape, std=0.02):
        return std * jax.random.normal(k, shape, dtype=jnp.float32)

    keys = iter(jax.random.split(key, 2 + 6 * cfg.num_hidden_layers))
    params = {
        "wte": nrm(next(keys), (cfg.vocab_size, H)).astype(jnp.bfloat16),
        "ln_f": jnp.ones((1, H), jnp.float32),
        "lm_head": nrm(next(keys), (H, cfg.vocab_size)).astype(jnp.bfloat16),
        "layers": [],
    }
    for _ in range(cfg.num_hidden_layers):
        c_attn_w = nrm(next(keys), (H, 3 * H))
        c_attn_b = nrm(next(keys), (1, 3 * H))
        # Fold the attention score scale 1/sqrt(Dh) into the Q projection (RoPE
        # is a rotation, so scaling commutes); the flash kernel then skips it.
        c_attn_w = c_attn_w.at[:, :H].multiply(scale)
        c_attn_b = c_attn_b.at[:, :H].multiply(scale)
        w1 = nrm(next(keys), (H, I))
        w2 = nrm(next(keys), (H, I))
        # Interleave w1/w2 N-blocks so each MLP grid step does one 2*tn-wide matmul.
        w12 = jnp.concatenate(
            [w1.reshape(H, nj_mlp, tn_mlp), w2.reshape(H, nj_mlp, tn_mlp)],
            axis=2).reshape(H, 2 * I)
        params["layers"].append({
            "ln1": jnp.ones((1, H), jnp.float32),
            "ln2": jnp.ones((1, H), jnp.float32),
            "c_attn_w": c_attn_w.astype(jnp.bfloat16),
            "c_attn_b": c_attn_b.astype(jnp.bfloat16),
            "c_proj_w": nrm(next(keys), (H, H)).astype(jnp.bfloat16),
            "w12": w12.astype(jnp.bfloat16),
            "mlp_c_proj": nrm(next(keys), (I, H)).astype(jnp.bfloat16),
        })
    return params


def rope_cos_sin(positions, head_dim, theta):
    half = head_dim // 2
    inv_freq = 1.0 / (theta ** (jnp.arange(0, half, dtype=jnp.float32) / half))
    freqs = positions[:, None].astype(jnp.float32) * inv_freq[None, :]  # (S, half)
    cos = jnp.concatenate([jnp.cos(freqs), jnp.cos(freqs)], axis=-1)    # (S, Dh)
    # Rotate-half sign folded in: rotate_half(x)*[sin,sin] == [x2,x1]*[-sin,sin]
    sin_folded = jnp.concatenate([-jnp.sin(freqs), jnp.sin(freqs)], axis=-1)
    return cos, sin_folded


def qwen_forward(params, cfg, input_ids, positions):
    H = cfg.hidden_size
    NH = cfg.num_attention_heads
    Dh = H // NH
    eps = cfg.layer_norm_epsilon
    S = input_ids.shape[0]

    cos, sin_folded = rope_cos_sin(positions, Dh, cfg.rope_theta)  # (S, Dh) f32

    # embedding gather (glue)
    h = params["wte"][input_ids]                                   # (S, H) bf16

    for layer in params["layers"]:
        # Attention: RMSNorm + c_attn (output-tiled) + bias + RoPE fused;
        # head-column [S, 3H] layout, per-head blocks selected via BlockSpec;
        # c_proj fused with the residual add.
        qkv = fused_norm_qkv_rope(h, layer["ln1"], layer["c_attn_w"],
                                  layer["c_attn_b"], cos, sin_folded,
                                  NH, Dh, eps)                     # (S, 3H)
        attn_out = flash_attention(qkv, NH, Dh, S)                 # (S, H)
        h = matmul_residual(attn_out, layer["c_proj_w"], h)

        # MLP: RMSNorm + fused w1|w2 matmul + SwiGLU gate; c_proj + residual.
        gate = fused_norm_mlp_gate(h, layer["ln2"], layer["w12"], eps)  # (S, I)
        h = matmul_residual(gate, layer["mlp_c_proj"], h)

    # greedy "Sampler": only the last token's logits are needed.
    h_last = h[-1:, :]                                             # (1, H)
    logits = norm_lm_head_last(h_last, params["ln_f"], params["lm_head"], eps)
    next_token = jnp.argmax(logits[0], axis=-1)
    return logits, next_token


# ----------------------------------------------------------------- main


if __name__ == "__main__":
    cfg = Config()
    key = jax.random.PRNGKey(0)
    pkey, ikey = jax.random.split(key)

    params = init_params(cfg, pkey)

    S = 128
    input_ids = jax.random.randint(ikey, (S,), 0, cfg.vocab_size,
                                   dtype=jnp.int32)
    positions = jnp.arange(S, dtype=jnp.int32)

    logits, next_token = qwen_forward(params, cfg, input_ids, positions)
    jax.block_until_ready((logits, next_token))

    assert logits.shape == (1, cfg.vocab_size)
    assert bool(jnp.all(jnp.isfinite(logits)))
    assert 0 <= int(next_token) < cfg.vocab_size
    print("KERNEL_OK")
</pallas_src>

<mosaic_0001>
module attributes {stable_mosaic.version = 11 : i64} {
  func.func @_norm_qkv_rope_kernel(%arg0: i32, %arg1: i32, %arg2: memref<128x256xbf16, #tpu.memory_space<vmem>>, %arg3: memref<1x256xf32, #tpu.memory_space<vmem>>, %arg4: memref<256x256xbf16, #tpu.memory_space<vmem>>, %arg5: memref<1x256xbf16, #tpu.memory_space<vmem>>, %arg6: memref<128x128xf32, #tpu.memory_space<vmem>>, %arg7: memref<128x128xf32, #tpu.memory_space<vmem>>, %arg8: memref<128x256xbf16, #tpu.memory_space<vmem>>, %arg9: memref<128x256xbf16, #tpu.memory_space<vmem>>) attributes {dimension_semantics = [#tpu.dimension_semantics<parallel>, #tpu.dimension_semantics<arbitrary>], iteration_bounds = array<i64: 1, 3>, scalar_prefetch = 0 : i64, scratch_operands = 1 : i64, tpu.core_type = #tpu.core_type<tc>, window_params = [{transform_indices = @transform_0, window_bounds = array<i64: 128, 256>}, {pipeline_mode = #tpu.pipeline_mode<synchronous>, transform_indices = @transform_1, window_bounds = array<i64: 1, 256>}, {transform_indices = @transform_2, window_bounds = array<i64: 256, 256>}, {transform_indices = @transform_3, window_bounds = array<i64: 1, 256>}, {transform_indices = @transform_4, window_bounds = array<i64: 128, 128>}, {transform_indices = @transform_5, window_bounds = array<i64: 128, 128>}, {transform_indices = @transform_6, window_bounds = array<i64: 128, 256>}]} {
    %c0_i32 = arith.constant 0 : i32
    %0 = arith.cmpi eq, %arg1, %c0_i32 : i32
    %1 = arith.extui %0 : i1 to i32
    %c0_i32_0 = arith.constant 0 : i32
    %2 = arith.cmpi ne, %1, %c0_i32_0 : i32
    scf.if %2 {
      %c0_13 = arith.constant 0 : index
      %c0_14 = arith.constant 0 : index
      %19 = vector.load %arg2[%c0_13, %c0_14] : memref<128x256xbf16, #tpu.memory_space<vmem>>, vector<128x256xbf16>
      %20 = arith.extf %19 : vector<128x256xbf16> to vector<128x256xf32>
      %21 = arith.mulf %20, %20 : vector<128x256xf32>
      %cst_15 = arith.constant dense<0.000000e+00> : vector<128xf32>
      %22 = vector.multi_reduction <add>, %21, %cst_15 [1] : vector<128x256xf32> to vector<128xf32>
      %23 = vector.shape_cast %22 : vector<128xf32> to vector<128x1xf32>
      %cst_16 = arith.constant 2.560000e+02 : f32
      %24 = vector.broadcast %cst_16 : f32 to vector<128x1xf32>
      %25 = arith.divf %23, %24 : vector<128x1xf32>
      %cst_17 = arith.constant 9.99999997E-7 : f32
      %26 = vector.broadcast %cst_17 : f32 to vector<128x1xf32>
      %27 = arith.addf %25, %26 : vector<128x1xf32>
      %28 = math.rsqrt %27 : vector<128x1xf32>
      %29 = vector.broadcast %28 : vector<128x1xf32> to vector<128x256xf32>
      %30 = arith.mulf %20, %29 : vector<128x256xf32>
      %c0_18 = arith.constant 0 : index
      %c0_19 = arith.constant 0 : index
      %31 = vector.load %arg3[%c0_18, %c0_19] : memref<1x256xf32, #tpu.memory_space<vmem>>, vector<1x256xf32>
      %32 = vector.broadcast %31 : vector<1x256xf32> to vector<128x256xf32>
      %33 = arith.mulf %30, %32 : vector<128x256xf32>
      %34 = arith.truncf %33 : vector<128x256xf32> to vector<128x256xbf16>
      %c0_20 = arith.constant 0 : index
      %c0_21 = arith.constant 0 : index
      %35 = vector.load %arg9[%c0_20, %c0_21] : memref<128x256xbf16, #tpu.memory_space<vmem>>, vector<128x256xbf16>
      tpu.vector_store %arg9[%c0_20, %c0_21], %34 {strides = array<i32>} : memref<128x256xbf16, #tpu.memory_space<vmem>>, vector<128x256xbf16>,
    } else {
    }
    %c0 = arith.constant 0 : index
    %c0_1 = arith.constant 0 : index
    %3 = vector.load %arg9[%c0, %c0_1] : memref<128x256xbf16, #tpu.memory_space<vmem>>, vector<128x256xbf16>
    %c0_2 = arith.constant 0 : index
    %c0_3 = arith.constant 0 : index
    %4 = vector.load %arg4[%c0_2, %c0_3] : memref<256x256xbf16, #tpu.memory_space<vmem>>, vector<256x256xbf16>
    %cst = arith.constant dense<0.000000e+00> : vector<128x256xf32>
    %5 = tpu.matmul %3, %4, %cst {dimension_numbers = #tpu.dot_dimension_numbers<[1], [0], [0], [1], [0, 0, 1, 1], [], []>} : vector<128x256xbf16>, vector<256x256xbf16>, vector<128x256xf32> -> vector<128x256xf32>
    %c0_4 = arith.constant 0 : index
    %c0_5 = arith.constant 0 : index
    %6 = vector.load %arg5[%c0_4, %c0_5] : memref<1x256xbf16, #tpu.memory_space<vmem>>, vector<1x256xbf16>
    %7 = arith.extf %6 : vector<1x256xbf16> to vector<1x256xf32>
    %8 = vector.broadcast %7 : vector<1x256xf32> to vector<128x256xf32>
    %9 = arith.addf %5, %8 : vector<128x256xf32>
    %c0_6 = arith.constant 0 : index
    %c0_7 = arith.constant 0 : index
    %10 = vector.load %arg6[%c0_6, %c0_7] : memref<128x128xf32, #tpu.memory_space<vmem>>, vector<128x128xf32>
    %c0_8 = arith.constant 0 : index
    %c0_9 = arith.constant 0 : index
    %11 = vector.load %arg7[%c0_8, %c0_9] : memref<128x128xf32, #tpu.memory_space<vmem>>, vector<128x128xf32>
    %c256_i32 = arith.constant 256 : i32
    %12 = arith.muli %arg1, %c256_i32 : i32
    %c512_i32 = arith.constant 512 : i32
    %13 = arith.cmpi slt, %12, %c512_i32 : i32
    %14 = arith.extui %13 : i1 to i32
    %c0_i32_10 = arith.constant 0 : i32
    %15 = arith.cmpi ne, %14, %c0_i32_10 : i32
    scf.if %15 {
      %19 = vector.extract_strided_slice %9 {offsets = [0, 0], sizes = [128, 128], strides = [1, 1]} : vector<128x256xf32> to vector<128x128xf32>
      %20 = vector.extract_strided_slice %19 {offsets = [0, 64], sizes = [128, 64], strides = [1, 1]} : vector<128x128xf32> to vector<128x64xf32>
      %21 = vector.extract_strided_slice %19 {offsets = [0, 0], sizes = [128, 64], strides = [1, 1]} : vector<128x128xf32> to vector<128x64xf32>
      %22 = tpu.concatenate %20, %21 in 1 : vector<128x64xf32>, vector<128x64xf32> -> vector<128x128xf32>
      %23 = arith.mulf %19, %10 : vector<128x128xf32>
      %24 = arith.mulf %22, %11 : vector<128x128xf32>
      %25 = arith.addf %23, %24 : vector<128x128xf32>
      %26 = vector.extract_strided_slice %9 {offsets = [0, 128], sizes = [128, 128], strides = [1, 1]} : vector<128x256xf32> to vector<128x128xf32>
      %27 = vector.extract_strided_slice %26 {offsets = [0, 64], sizes = [128, 64], strides = [1, 1]} : vector<128x128xf32> to vector<128x64xf32>
      %28 = vector.extract_strided_slice %26 {offsets = [0, 0], sizes = [128, 64], strides = [1, 1]} : vector<128x128xf32> to vector<128x64xf32>
      %29 = tpu.concatenate %27, %28 in 1 : vector<128x64xf32>, vector<128x64xf32> -> vector<128x128xf32>
      %30 = arith.mulf %26, %10 : vector<128x128xf32>
      %31 = arith.mulf %29, %11 : vector<128x128xf32>
      %32 = arith.addf %30, %31 : vector<128x128xf32>
      %33 = tpu.concatenate %25, %32 in 1 : vector<128x128xf32>, vector<128x128xf32> -> vector<128x256xf32>
      %34 = arith.truncf %33 : vector<128x256xf32> to vector<128x256xbf16>
      %c0_13 = arith.constant 0 : index
      %c0_14 = arith.constant 0 : index
      %35 = vector.load %arg8[%c0_13, %c0_14] : memref<128x256xbf16, #tpu.memory_space<vmem>>, vector<128x256xbf16>
      tpu.vector_store %arg8[%c0_13, %c0_14], %34 {strides = array<i32>} : memref<128x256xbf16, #tpu.memory_space<vmem>>, vector<128x256xbf16>,
    } else {
    }
    %c512_i32_11 = arith.constant 512 : i32
    %16 = arith.cmpi sge, %12, %c512_i32_11 : i32
    %17 = arith.extui %16 : i1 to i32
    %c0_i32_12 = arith.constant 0 : i32
    %18 = arith.cmpi ne, %17, %c0_i32_12 : i32
    scf.if %18 {
      %19 = arith.truncf %9 : vector<128x256xf32> to vector<128x256xbf16>
      %c0_13 = arith.constant 0 : index
      %c0_14 = arith.constant 0 : index
      %20 = vector.load %arg8[%c0_13, %c0_14] : memref<128x256xbf16, #tpu.memory_space<vmem>>, vector<128x256xbf16>
      tpu.vector_store %arg8[%c0_13, %c0_14], %19 {strides = array<i32>} : memref<128x256xbf16, #tpu.memory_space<vmem>>, vector<128x256xbf16>,
    } else {
    }
    return
  }
  func.func @transform_0(%arg0: i32, %arg1: i32) -> (i32, i32) {
    %c0_i32 = arith.constant 0 : i32
    %c0_i32_0 = arith.constant 0 : i32
    return %arg0, %c0_i32 : i32, i32
  }
  func.func @transform_1(%arg0: i32, %arg1: i32) -> (i32, i32) {
    %c0_i32 = arith.constant 0 : i32
    %c0_i32_0 = arith.constant 0 : i32
    %c0_i32_1 = arith.constant 0 : i32
    return %c0_i32, %c0_i32_0 : i32, i32
  }
  func.func @transform_2(%arg0: i32, %arg1: i32) -> (i32, i32) {
    %c0_i32 = arith.constant 0 : i32
    %c0_i32_0 = arith.constant 0 : i32
    return %c0_i32, %arg1 : i32, i32
  }
  func.func @transform_3(%arg0: i32, %arg1: i32) -> (i32, i32) {
    %c0_i32 = arith.constant 0 : i32
    %c0_i32_0 = arith.constant 0 : i32
    return %c0_i32, %arg1 : i32, i32
  }
  func.func @transform_4(%arg0: i32, %arg1: i32) -> (i32, i32) {
    %c0_i32 = arith.constant 0 : i32
    %c0_i32_0 = arith.constant 0 : i32
    return %arg0, %c0_i32 : i32, i32
  }
  func.func @transform_5(%arg0: i32, %arg1: i32) -> (i32, i32) {
    %c0_i32 = arith.constant 0 : i32
    %c0_i32_0 = arith.constant 0 : i32
    return %arg0, %c0_i32 : i32, i32
  }
  func.func @transform_6(%arg0: i32, %arg1: i32) -> (i32, i32) {
    %c0_i32 = arith.constant 0 : i32
    return %arg0, %arg1 : i32, i32
  }
}

</mosaic_0001>

<llo_original>
// kernel: tpu_custom_call.1
$region0: #{tpu_custom_call.1}
  #allocation0 [shape = 'u32[]', space=smem, size = 0x4, offset = 0x4, fixed_abs, tag = 'smem constant byte address 0x4 - core index']
  #allocation1 [shape = 'u32[144,128]{1,0:T(1,128)}', space=vmem, size = 0x12000, scoped, tag = 'internal scratch']
  #allocation2 [shape = 'bf16[128,256]{1,0:T(16,128)(2,1)}', space=vmem, size = 0x10000, scoped, tag = 'scratch operand']
  %s0 = inlined_call_operand.hbm [shape: bf16[128,256], index: 0, kind: input, shape index: {}]
  %s1 = inlined_call_operand.vmem [shape: f32[1,256], index: 1, kind: input, shape index: {}]
  %s2 = inlined_call_operand.hbm [shape: bf16[256,768], index: 2, kind: input, shape index: {}]
  %s3 = inlined_call_operand.vmem [shape: bf16[1,768], index: 3, kind: input, shape index: {}]
  %s4 = inlined_call_operand.hbm [shape: f32[128,128], index: 4, kind: input, shape index: {}]
  %s5 = inlined_call_operand.hbm [shape: f32[128,128], index: 5, kind: input, shape index: {}]
  %s6 = inlined_call_operand.hbm [shape: bf16[128,768], index: 6, kind: output, shape index: {}]
  %s7 = sld [smem:[#allocation0]]
  $region85: #{tpu_custom_call.1} parent=0
    _
  %s9 = ssub.s32 1, %s7
  %s10 = scalar_select 0, %s9, %s7
  $region1: #{tpu_custom_call.1} parent=0
    #allocation3 [shape = 'u8[65536]{0}', space=vmem, size = 0x10000, scoped, tag = 'input window, operand 0, single buffered']
    #allocation4 [shape = 's32[2]{0}', space=sflag, size = 0x8, scoped, tag = 'scoped memory for tpu_custom_call.1']
    #allocation5 [shape = 's32[2]{0}', space=sflag, size = 0x8, scoped, tag = 'scoped memory for tpu_custom_call.1']
    #allocation6 [shape = 'u8[262144]{0}', space=vmem, size = 0x40000, scoped, tag = 'input window, operand 2']
    #allocation7 [shape = 's32[2]{0}', space=sflag, size = 0x8, scoped, tag = 'scoped memory for tpu_custom_call.1']
    #allocation8 [shape = 'u8[65536]{0}', space=vmem, size = 0x10000, scoped, tag = 'input window, operand 4, single buffered']
    #allocation9 [shape = 'u8[65536]{0}', space=vmem, size = 0x10000, scoped, tag = 'input window, operand 5, single buffered']
    #allocation10 [shape = 's32[1]{0}', space=sflag, size = 0x4, scoped, tag = 'scoped memory for tpu_custom_call.1']
    #allocation11 [shape = 'u8[131072]{0}', space=vmem, size = 0x20000, scoped, tag = 'output window, operand 0']
    %11 = vsyncpa [#allocation4], 0
    %12 = vsyncpa [#allocation7], 0
    %s13 = scalar_lea.sflag [#allocation7], 1
    %14 = vsyncpa %s13, 0
    %15 = vsyncpa [#allocation10], 0
    %16 = vsyncpa [#allocation5], 0
    %s17 = scalar_lea.sflag [#allocation5], 1
    %18 = vsyncpa %s17, 0
    loop: start=0, step=1, limit=5
    $region2: #{tpu_custom_call.1} parent=1 // loop_pre_header
      _
    $region3: #{tpu_custom_call.1} parent=1 // loop_header
      %s20 = sphi 0, %s24
      %p21 = scmp.ge.s32.totalorder %s20, 5
      %s27 = sphi 0, %s39
      %s28 = sphi 0, %s35
      %s29 = sphi 0, %s27
      %s30 = sphi 0, %s28
      %s31 = sphi 0, %s29
      %s32 = sphi 0, %s30
      %s42 = sphi 0, %s44
      %s45 = sphi 0, %s42
      %s46 = sphi 0, %s45
      %s62 = sphi 0, %s46
      %s66 = sphi 0, %s66
      %s68 = sphi 0, %s66
      %s69 = sphi 0, %s68
      %s83 = sphi 0, %s69
      %s89 = sphi 0, %s91
      %s92 = sphi 0, %s89
      %s93 = sphi 0, %s92
      %s109 = sphi 0, %s93
      %s115 = sphi 0, %s117
      %s118 = sphi 0, %s115
      %s119 = sphi 0, %s118
      %s135 = sphi 0, %s119
      %s141 = sphi 0, %s143
      %s144 = sphi 0, %s141
      %s145 = sphi 0, %s144
      %s161 = sphi 0, %s145
      %s167 = sphi 0, %s169
      %s170 = sphi 0, %s167
      %s171 = sphi 0, %s170
      %s187 = sphi 0, %s171
      %s195 = sphi 0, %s197
      %s198 = sphi 0, %s195
      %s199 = sphi 0, %s198
      %s215 = sphi 0, %s199
    $region4: #{tpu_custom_call.1} parent=1 // loop_header_branch
      %23 = sbr.rel (%p21) target = $region8
    $region5: #{tpu_custom_call.1} parent=1 // loop_body
      %s25 = ssub.s32 %s20, 1
      %s26 = ssub.s32 %s20, 2
      %s33 = sadd.s32 1, %s28
      %p34 = scmp.ge.s32.totalorder %s33, 3
      %s35 = scalar_select %p34, 0, %s33
      %s36 = sadd.s32 1, %s27
      %s37 = scalar_select %p34, %s36, %s27
      %p38 = scmp.ge.s32.totalorder %s37, 1
      %s39 = scalar_select %p38, 0, %s37
      %s40 = ssub.s32 %s27, %s39
      %p41 = scmp.eq.s32.totalorder %s40, 0
      %s43 = sadd.s32 %s42, 1
      %s44 = scalar_select %p41, %s42, %s43
      %p47 = pneg %p41
      %p48 = scmp.eq.s32.totalorder %s20, 2
      %p49 = por %p47, %p48
      %p50 = scmp.ne.s32.totalorder %s42, %s45
      %p51 = scmp.eq.s32.totalorder %s20, 0
      %p52 = por %p50, %p51
      %p53 = scmp.ne.s32.totalorder %s42, %s45
      %p54 = scmp.eq.s32.totalorder %s25, 2
      %p55 = por %p53, %p54
      %p56 = scmp.ne.s32.totalorder %s45, %s46
      %p57 = scmp.eq.s32.totalorder %s25, 0
      %p58 = por %p56, %p57
      %p59 = scmp.ne.s32.totalorder %s45, %s46
      %p60 = scmp.eq.s32.totalorder %s26, 2
      %p61 = por %p59, %p60
      %p63 = scmp.ne.s32.totalorder %s46, %s62
      %p64 = scmp.eq.s32.totalorder %s26, 0
      %p65 = por %p63, %p64
      %s67 = sadd.s32 %s66, 1
      %p70 = scmp.eq.s32.totalorder %s20, 2
      %p71 = scmp.ne.s32.totalorder %s66, %s68
      %p72 = scmp.eq.s32.totalorder %s20, 0
      %p73 = por %p71, %p72
      %p74 = scmp.ne.s32.totalorder %s66, %s68
      %p75 = scmp.eq.s32.totalorder %s25, 2
      %p76 = por %p74, %p75
      %p77 = scmp.ne.s32.totalorder %s68, %s69
      %p78 = scmp.eq.s32.totalorder %s25, 0
      %p79 = por %p77, %p78
      %p80 = scmp.ne.s32.totalorder %s68, %s69
      %p81 = scmp.eq.s32.totalorder %s26, 2
      %p82 = por %p80, %p81
      %p84 = scmp.ne.s32.totalorder %s69, %s83
      %p85 = scmp.eq.s32.totalorder %s26, 0
      %p86 = por %p84, %p85
      %s87 = ssub.s32 %s28, %s35
      %p88 = scmp.eq.s32.totalorder %s87, 0
      %s90 = sadd.s32 %s89, 1
      %s91 = scalar_select %p88, %s89, %s90
      %p94 = pneg %p88
      %p95 = scmp.eq.s32.totalorder %s20, 2
      %p96 = por %p94, %p95
      %p97 = scmp.ne.s32.totalorder %s89, %s92
      %p98 = scmp.eq.s32.totalorder %s20, 0
      %p99 = por %p97, %p98
      %p100 = scmp.ne.s32.totalorder %s89, %s92
      %p101 = scmp.eq.s32.totalorder %s25, 2
      %p102 = por %p100, %p101
      %p103 = scmp.ne.s32.totalorder %s92, %s93
      %p104 = scmp.eq.s32.totalorder %s25, 0
      %p105 = por %p103, %p104
      %p106 = scmp.ne.s32.totalorder %s92, %s93
      %p107 = scmp.eq.s32.totalorder %s26, 2
      %p108 = por %p106, %p107
      %p110 = scmp.ne.s32.totalorder %s93, %s109
      %p111 = scmp.eq.s32.totalorder %s26, 0
      %p112 = por %p110, %p111
      %s113 = ssub.s32 %s28, %s35
      %p114 = scmp.eq.s32.totalorder %s113, 0
      %s116 = sadd.s32 %s115, 1
      %s117 = scalar_select %p114, %s115, %s116
      %p120 = pneg %p114
      %p121 = scmp.eq.s32.totalorder %s20, 2
      %p122 = por %p120, %p121
      %p123 = scmp.ne.s32.totalorder %s115, %s118
      %p124 = scmp.eq.s32.totalorder %s20, 0
      %p125 = por %p123, %p124
      %p126 = scmp.ne.s32.totalorder %s115, %s118
      %p127 = scmp.eq.s32.totalorder %s25, 2
      %p128 = por %p126, %p127
      %p129 = scmp.ne.s32.totalorder %s118, %s119
      %p130 = scmp.eq.s32.totalorder %s25, 0
      %p131 = por %p129, %p130
      %p132 = scmp.ne.s32.totalorder %s118, %s119
      %p133 = scmp.eq.s32.totalorder %s26, 2
      %p134 = por %p132, %p133
      %p136 = scmp.ne.s32.totalorder %s119, %s135
      %p137 = scmp.eq.s32.totalorder %s26, 0
      %p138 = por %p136, %p137
      %s139 = ssub.s32 %s27, %s39
      %p140 = scmp.eq.s32.totalorder %s139, 0
      %s142 = sadd.s32 %s141, 1
      %s143 = scalar_select %p140, %s141, %s142
      %p146 = pneg %p140
      %p147 = scmp.eq.s32.totalorder %s20, 2
      %p148 = por %p146, %p147
      %p149 = scmp.ne.s32.totalorder %s141, %s144
      %p150 = scmp.eq.s32.totalorder %s20, 0
      %p151 = por %p149, %p150
      %p152 = scmp.ne.s32.totalorder %s141, %s144
      %p153 = scmp.eq.s32.totalorder %s25, 2
      %p154 = por %p152, %p153
      %p155 = scmp.ne.s32.totalorder %s144, %s145
      %p156 = scmp.eq.s32.totalorder %s25, 0
      %p157 = por %p155, %p156
      %p158 = scmp.ne.s32.totalorder %s144, %s145
      %p159 = scmp.eq.s32.totalorder %s26, 2
      %p160 = por %p158, %p159
      %p162 = scmp.ne.s32.totalorder %s145, %s161
      %p163 = scmp.eq.s32.totalorder %s26, 0
      %p164 = por %p162, %p163
      %s165 = ssub.s32 %s27, %s39
      %p166 = scmp.eq.s32.totalorder %s165, 0
      %s168 = sadd.s32 %s167, 1
      %s169 = scalar_select %p166, %s167, %s168
      %p172 = pneg %p166
      %p173 = scmp.eq.s32.totalorder %s20, 2
      %p174 = por %p172, %p173
      %p175 = scmp.ne.s32.totalorder %s167, %s170
      %p176 = scmp.eq.s32.totalorder %s20, 0
      %p177 = por %p175, %p176
      %p178 = scmp.ne.s32.totalorder %s167, %s170
      %p179 = scmp.eq.s32.totalorder %s25, 2
      %p180 = por %p178, %p179
      %p181 = scmp.ne.s32.totalorder %s170, %s171
      %p182 = scmp.eq.s32.totalorder %s25, 0
      %p183 = por %p181, %p182
      %p184 = scmp.ne.s32.totalorder %s170, %s171
      %p185 = scmp.eq.s32.totalorder %s26, 2
      %p186 = por %p184, %p185
      %p188 = scmp.ne.s32.totalorder %s171, %s187
      %p189 = scmp.eq.s32.totalorder %s26, 0
      %p190 = por %p188, %p189
      %s191 = ssub.s32 %s27, %s39
      %s192 = ssub.s32 %s28, %s35
      %s193 = sor.u32 %s191, %s192
      %p194 = scmp.eq.s32.totalorder %s193, 0
      %s196 = sadd.s32 %s195, 1
      %s197 = scalar_select %p194, %s195, %s196
      %p200 = pneg %p194
      %p201 = scmp.eq.s32.totalorder %s20, 2
      %p202 = por %p200, %p201
      %p203 = scmp.ne.s32.totalorder %s195, %s198
      %p204 = scmp.eq.s32.totalorder %s20, 0
      %p205 = por %p203, %p204
      %p206 = scmp.ne.s32.totalorder %s195, %s198
      %p207 = scmp.eq.s32.totalorder %s25, 2
      %p208 = por %p206, %p207
      %p209 = scmp.ne.s32.totalorder %s198, %s199
      %p210 = scmp.eq.s32.totalorder %s25, 0
      %p211 = por %p209, %p210
      %p212 = scmp.ne.s32.totalorder %s198, %s199
      %p213 = scmp.eq.s32.totalorder %s26, 2
      %p214 = por %p212, %p213
      %p216 = scmp.ne.s32.totalorder %s199, %s215
      %p217 = scmp.eq.s32.totalorder %s26, 0
      %p218 = por %p216, %p217
      %p219 = scmp.le.s32.totalorder 1, %s20
      %p220 = scmp.lt.s32.totalorder %s20, 4
      %p221 = pnand %p219, %p220
      %p222 = pneg %p221
      // Predicated region
      $region9: #{tpu_custom_call.1} parent=5 // pred_check
        _
      $region10: #{tpu_custom_call.1} parent=5 // pred_check_branch
        %224 = sbr.rel (%p221) target = $region12
      $region11: #{tpu_custom_call.1} parent=5 // pred_region
        %s225 = ssub.s32 %s20, 1
        // Predicated region
        $region13: #{tpu_custom_call.1} parent=11 // pred_check
          %p226 = pneg %p58
        $region14: #{tpu_custom_call.1} parent=11 // pred_check_branch
          %228 = sbr.rel (%p226) target = $region16
        $region15: #{tpu_custom_call.1} parent=11 // pred_region
          %s229 = smul.u32 16, %s29
          %s231 = ssub.s32 2048, 2048
          %232 = vsyncadd [#allocation4], %s231
          %s233 = smul.addr %s229, 2
          %s234 = smul.addr %s233, 64
          %s235 = scalar_lea.hbm %s0, %s234
          %s236 = sshll.u32 [#allocation3], 4
          %s237 = int_to_ptr.vmem [resolvable:$true] %s236
          %242 = dma.hbm_to_vmem [thread:$0]  %s235, 2048, %s237, [#allocation4], 128, 128, 8
        $region16: #{tpu_custom_call.1} parent=11 // pred_fallthru
          _
        // Predicated region
        $region17: #{tpu_custom_call.1} parent=11 // pred_check
          %p243 = pneg %p79
        $region18: #{tpu_custom_call.1} parent=11 // pred_check_branch
          %245 = sbr.rel (%p243) target = $region20
        $region19: #{tpu_custom_call.1} parent=11 // pred_region
          _
        $region20: #{tpu_custom_call.1} parent=11 // pred_fallthru
          _
        // Predicated region
        $region21: #{tpu_custom_call.1} parent=11 // pred_check
          %p246 = pneg %p157
        $region22: #{tpu_custom_call.1} parent=11 // pred_check_branch
          %248 = sbr.rel (%p246) target = $region24
        $region23: #{tpu_custom_call.1} parent=11 // pred_region
          %s249 = smul.u32 16, %s29
          %s251 = ssub.s32 2048, 2048
          %252 = vsyncadd [#allocation7], %s251
          %s253 = smul.addr %s249, 128
          %s254 = scalar_lea.hbm %s4, %s253
          %s255 = sshll.u32 [#allocation8], 4
          %s256 = int_to_ptr.vmem [resolvable:$true] %s255
          %261 = dma.hbm_to_vmem [thread:$0]  %s254, 2048, %s256, [#allocation7], 128, 128, 8
        $region24: #{tpu_custom_call.1} parent=11 // pred_fallthru
          _
        // Predicated region
        $region25: #{tpu_custom_call.1} parent=11 // pred_check
          %p262 = pneg %p183
        $region26: #{tpu_custom_call.1} parent=11 // pred_check_branch
          %264 = sbr.rel (%p262) target = $region28
        $region27: #{tpu_custom_call.1} parent=11 // pred_region
          %s265 = smul.u32 16, %s29
          %s267 = ssub.s32 2048, 2048
          %268 = vsyncadd [#allocation10], %s267
          %s269 = smul.addr %s265, 128
          %s270 = scalar_lea.hbm %s5, %s269
          %s271 = sshll.u32 [#allocation9], 4
          %s272 = int_to_ptr.vmem [resolvable:$true] %s271
          %277 = dma.hbm_to_vmem [thread:$0]  %s270, 2048, %s272, [#allocation10], 128, 128, 8
        $region28: #{tpu_custom_call.1} parent=11 // pred_fallthru
          _
      $region12: #{tpu_custom_call.1} parent=5 // pred_fallthru
        _
      %p278 = scmp.lt.s32.totalorder %s20, 3
      // Predicated region
      $region29: #{tpu_custom_call.1} parent=5 // pred_check
        %p279 = pneg %p278
      $region30: #{tpu_custom_call.1} parent=5 // pred_check_branch
        %281 = sbr.rel (%p279) target = $region32
      $region31: #{tpu_custom_call.1} parent=5 // pred_region
        // Predicated region
        $region33: #{tpu_custom_call.1} parent=31 // pred_check
          %p282 = pneg %p99
        $region34: #{tpu_custom_call.1} parent=31 // pred_check_branch
          %284 = sbr.rel (%p282) target = $region36
        $region35: #{tpu_custom_call.1} parent=31 // pred_region
          %s285 = sand.u32 %s20, 1
          %s286 = scalar_lea.sflag [#allocation7], %s285
          %s287 = sand.u32 %s89, 1
          %s288 = smul.addr %s287, 256
          %s289 = scalar_lea.vmem [#allocation6], %s288
          %s290 = smul.u32 2, %s28
          %s292 = ssub.s32 4096, 4096
          %293 = vsyncadd %s286, %s292
          %s294 = smul.addr %s290, 64
          %s295 = scalar_lea.hbm %s2, %s294
          %s296 = sshll.u32 %s289, 4
          %s297 = int_to_ptr.vmem [resolvable:$true] %s296
          %302 = dma.hbm_to_vmem [thread:$0]  %s295, 4096, %s297, %s286, 384, 128, 8
        $region36: #{tpu_custom_call.1} parent=31 // pred_fallthru
          _
        // Predicated region
        $region37: #{tpu_custom_call.1} parent=31 // pred_check
          %p303 = pneg %p125
        $region38: #{tpu_custom_call.1} parent=31 // pred_check_branch
          %305 = sbr.rel (%p303) target = $region40
        $region39: #{tpu_custom_call.1} parent=31 // pred_region
          %s306 = smul.u32 2, %s28
          %p307 = scmp.lt.s32.totalorder %s306, 5
          %s308 = scalar_select %p307, %s306, 5
          %s309 = scalar_lea.vmem %s3, %s308
          %s310 = smul.u32 2, %s28
        $region40: #{tpu_custom_call.1} parent=31 // pred_fallthru
          _
      $region32: #{tpu_custom_call.1} parent=5 // pred_fallthru
        _
      %p311 = scmp.le.s32.totalorder 1, %s20
      %p312 = scmp.lt.s32.totalorder %s20, 4
      %p313 = pnand %p311, %p312
      %p314 = pneg %p313
      // Predicated region
      $region41: #{tpu_custom_call.1} parent=5 // pred_check
        _
      $region42: #{tpu_custom_call.1} parent=5 // pred_check_branch
        %316 = sbr.rel (%p313) target = $region44
      $region43: #{tpu_custom_call.1} parent=5 // pred_region
        %s317 = ssub.s32 %s20, 1
        // Predicated region
        $region45: #{tpu_custom_call.1} parent=43 // pred_check
          %p318 = pneg %p58
        $region46: #{tpu_custom_call.1} parent=43 // pred_check_branch
          %320 = sbr.rel (%p318) target = $region48
        $region47: #{tpu_custom_call.1} parent=43 // pred_region
          %321 = dma.done [#allocation4], 2048
        $region48: #{tpu_custom_call.1} parent=43 // pred_fallthru
          _
        %s322 = sand.u32 %s25, 1
        %s323 = scalar_lea.sflag [#allocation7], %s322
        %s324 = sand.u32 %s92, 1
        %s325 = smul.addr %s324, 256
        %s326 = scalar_lea.vmem [#allocation6], %s325
        // Predicated region
        $region49: #{tpu_custom_call.1} parent=43 // pred_check
          %p327 = pneg %p105
        $region50: #{tpu_custom_call.1} parent=43 // pred_check_branch
          %329 = sbr.rel (%p327) target = $region52
        $region51: #{tpu_custom_call.1} parent=43 // pred_region
          %330 = dma.done %s323, 4096
        $region52: #{tpu_custom_call.1} parent=43 // pred_fallthru
          _
        // Predicated region
        $region53: #{tpu_custom_call.1} parent=43 // pred_check
          %p331 = pneg %p157
        $region54: #{tpu_custom_call.1} parent=43 // pred_check_branch
          %333 = sbr.rel (%p331) target = $region56
        $region55: #{tpu_custom_call.1} parent=43 // pred_region
          %334 = dma.done [#allocation7], 2048
        $region56: #{tpu_custom_call.1} parent=43 // pred_fallthru
          _
        // Predicated region
        $region57: #{tpu_custom_call.1} parent=43 // pred_check
          %p335 = pneg %p183
        $region58: #{tpu_custom_call.1} parent=43 // pred_check_branch
          %337 = sbr.rel (%p335) target = $region60
        $region59: #{tpu_custom_call.1} parent=43 // pred_region
          %338 = dma.done [#allocation10], 2048
        $region60: #{tpu_custom_call.1} parent=43 // pred_fallthru
          _
        %p339 = pneg %p58
        %p340 = pneg %p55
        %p341 = pneg %p79
        %p342 = pneg %p76
        %s343 = sand.u32 %s25, 1
        %s344 = scalar_lea.sflag [#allocation7], %s343
        %s345 = sand.u32 %s92, 1
        %s346 = smul.addr %s345, 256
        %s347 = scalar_lea.vmem [#allocation6], %s346
        %p348 = pneg %p105
        %p349 = pneg %p102
        %s350 = smul.u32 2, %s30
        %p351 = scmp.lt.s32.totalorder %s350, 5
        %s352 = scalar_select %p351, %s350, 5
        %s353 = scalar_lea.vmem %s3, %s352
        %p354 = pneg %p131
        %p355 = pneg %p128
        %p356 = pneg %p157
        %p357 = pneg %p154
        %p358 = pneg %p183
        %p359 = pneg %p180
        %p360 = pneg %p211
        %p361 = pneg %p208
        %s362 = sand.u32 %s198, 1
        %s363 = scalar_lea.sflag [#allocation5], %s362
        %s364 = sand.u32 %s198, 1
        %s365 = smul.addr %s364, 128
        %s366 = scalar_lea.vmem [#allocation11], %s365
        %s367 = smul.u32 16, %s29
        %s368 = smul.u32 2, %s30
        %s369 = smul.u32 2, %s30
        %p370 = scmp.lt.s32.totalorder %s369, 5
        %s371 = scalar_select %p370, %s369, 5
        %s372 = scalar_lea.vmem %s3, %s371
        %s373 = smul.u32 2, %s30
        %s374 = smul.u32 16, %s29
        %s375 = smul.u32 16, %s29
        %s376 = smul.u32 16, %s29
        %s377 = smul.u32 2, %s30
        %p378 = scmp.eq.s32.totalorder %s30, 0
        // Predicated region
        $region61: #{tpu_custom_call.1} parent=43 // pred_check
          %p379 = pneg %p378
        $region62: #{tpu_custom_call.1} parent=43 // pred_check_branch
          %381 = sbr.rel (%p379) target = $region64
        $region63: #{tpu_custom_call.1} parent=43 // pred_region
          %v382 = vld [vmem:[#allocation3] sm:$0xff]
          %v383 = vld [vmem:[#allocation3 + $0x8] sm:$0xff]
          %v384 = vld [vmem:[#allocation3 + $0x10] sm:$0xff]
          %v385 = vld [vmem:[#allocation3 + $0x18] sm:$0xff]
          %v386 = vld [vmem:[#allocation3 + $0x20] sm:$0xff]
          %v387 = vld [vmem:[#allocation3 + $0x28] sm:$0xff]
          %v388 = vld [vmem:[#allocation3 + $0x30] sm:$0xff]
          %v389 = vld [vmem:[#allocation3 + $0x38] sm:$0xff]
          %v390 = vld [vmem:[#allocation3 + $0x40] sm:$0xff]
          %v391 = vld [vmem:[#allocation3 + $0x48] sm:$0xff]
          %v392 = vld [vmem:[#allocation3 + $0x50] sm:$0xff]
          %v393 = vld [vmem:[#allocation3 + $0x58] sm:$0xff]
          %v394 = vld [vmem:[#allocation3 + $0x60] sm:$0xff]
          %v395 = vld [vmem:[#allocation3 + $0x68] sm:$0xff]
          %v396 = vld [vmem:[#allocation3 + $0x70] sm:$0xff]
          %v397 = vld [vmem:[#allocation3 + $0x78] sm:$0xff]
          %v398 = vunpack.c.l.bf16 %v382
          %v399 = vunpack.c.h.bf16 %v382
          %v400 = vunpack.c.l.bf16 %v383
          %v401 = vunpack.c.h.bf16 %v383
          %v402 = vunpack.c.l.bf16 %v384
          %v403 = vunpack.c.h.bf16 %v384
          %v404 = vunpack.c.l.bf16 %v385
          %v405 = vunpack.c.h.bf16 %v385
          %v406 = vunpack.c.l.bf16 %v386
          %v407 = vunpack.c.h.bf16 %v386
          %v408 = vunpack.c.l.bf16 %v387
          %v409 = vunpack.c.h.bf16 %v387
          %v410 = vunpack.c.l.bf16 %v388
          %v411 = vunpack.c.h.bf16 %v388
          %v412 = vunpack.c.l.bf16 %v389
          %v413 = vunpack.c.h.bf16 %v389
          %v414 = vunpack.c.l.bf16 %v390
          %v415 = vunpack.c.h.bf16 %v390
          %v416 = vunpack.c.l.bf16 %v391
          %v417 = vunpack.c.h.bf16 %v391
          %v418 = vunpack.c.l.bf16 %v392
          %v419 = vunpack.c.h.bf16 %v392
          %v420 = vunpack.c.l.bf16 %v393
          %v421 = vunpack.c.h.bf16 %v393
          %v422 = vunpack.c.l.bf16 %v394
          %v423 = vunpack.c.h.bf16 %v394
          %v424 = vunpack.c.l.bf16 %v395
          %v425 = vunpack.c.h.bf16 %v395
          %v426 = vunpack.c.l.bf16 %v396
          %v427 = vunpack.c.h.bf16 %v396
          %v428 = vunpack.c.l.bf16 %v397
          %v429 = vunpack.c.h.bf16 %v397
          %v430 = vmul.f32 %v398, %v398
          %v431 = vmul.f32 %v399, %v399
          %v432 = vmul.f32 %v400, %v400
          %v433 = vmul.f32 %v401, %v401
          %v434 = vmul.f32 %v402, %v402
          %v435 = vmul.f32 %v403, %v403
          %v436 = vmul.f32 %v404, %v404
          %v437 = vmul.f32 %v405, %v405
          %v438 = vmul.f32 %v406, %v406
          %v439 = vmul.f32 %v407, %v407
          %v440 = vmul.f32 %v408, %v408
          %v441 = vmul.f32 %v409, %v409
          %v442 = vmul.f32 %v410, %v410
          %v443 = vmul.f32 %v411, %v411
          %v444 = vmul.f32 %v412, %v412
          %v445 = vmul.f32 %v413, %v413
          %v446 = vmul.f32 %v414, %v414
          %v447 = vmul.f32 %v415, %v415
          %v448 = vmul.f32 %v416, %v416
          %v449 = vmul.f32 %v417, %v417
          %v450 = vmul.f32 %v418, %v418
          %v451 = vmul.f32 %v419, %v419
          %v452 = vmul.f32 %v420, %v420
          %v453 = vmul.f32 %v421, %v421
          %v454 = vmul.f32 %v422, %v422
          %v455 = vmul.f32 %v423, %v423
          %v456 = vmul.f32 %v424, %v424
          %v457 = vmul.f32 %v425, %v425
          %v458 = vmul.f32 %v426, %v426
          %v459 = vmul.f32 %v427, %v427
          %v460 = vmul.f32 %v428, %v428
          %v461 = vmul.f32 %v429, %v429
          %v462 = vadd.f32 %v430, %v431
          %463 = vadd.xlane.f32.xlu0 %v462
          %v464 = vpop.xlane.xlu0 %463
          %v465 = vadd.f32 %v432, %v433
          %466 = vadd.xlane.f32.xlu0 %v465
          %v467 = vpop.xlane.xlu0 %466
          %v468 = vadd.f32 %v434, %v435
          %469 = vadd.xlane.f32.xlu0 %v468
          %v470 = vpop.xlane.xlu0 %469
          %v471 = vadd.f32 %v436, %v437
          %472 = vadd.xlane.f32.xlu0 %v471
          %v473 = vpop.xlane.xlu0 %472
          %v474 = vadd.f32 %v438, %v439
          %475 = vadd.xlane.f32.xlu0 %v474
          %v476 = vpop.xlane.xlu0 %475
          %v477 = vadd.f32 %v440, %v441
          %478 = vadd.xlane.f32.xlu0 %v477
          %v479 = vpop.xlane.xlu0 %478
          %v480 = vadd.f32 %v442, %v443
          %481 = vadd.xlane.f32.xlu0 %v480
          %v482 = vpop.xlane.xlu0 %481
          %v483 = vadd.f32 %v444, %v445
          %484 = vadd.xlane.f32.xlu0 %v483
          %v485 = vpop.xlane.xlu0 %484
          %v486 = vadd.f32 %v446, %v447
          %487 = vadd.xlane.f32.xlu0 %v486
          %v488 = vpop.xlane.xlu0 %487
          %v489 = vadd.f32 %v448, %v449
          %490 = vadd.xlane.f32.xlu0 %v489
          %v491 = vpop.xlane.xlu0 %490
          %v492 = vadd.f32 %v450, %v451
          %493 = vadd.xlane.f32.xlu0 %v492
          %v494 = vpop.xlane.xlu0 %493
          %v495 = vadd.f32 %v452, %v453
          %496 = vadd.xlane.f32.xlu0 %v495
          %v497 = vpop.xlane.xlu0 %496
          %v498 = vadd.f32 %v454, %v455
          %499 = vadd.xlane.f32.xlu0 %v498
          %v500 = vpop.xlane.xlu0 %499
          %v501 = vadd.f32 %v456, %v457
          %502 = vadd.xlane.f32.xlu0 %v501
          %v503 = vpop.xlane.xlu0 %502
          %v504 = vadd.f32 %v458, %v459
          %505 = vadd.xlane.f32.xlu0 %v504
          %v506 = vpop.xlane.xlu0 %505
          %v507 = vadd.f32 %v460, %v461
          %508 = vadd.xlane.f32.xlu0 %v507
          %v509 = vpop.xlane.xlu0 %508
          %v510 = vrcp.pop 256.0
          %v511 = vmul.f32 %v464, %v510
          %v512 = vmul.f32 %v467, %v510
          %v513 = vmul.f32 %v470, %v510
          %v514 = vmul.f32 %v473, %v510
          %v515 = vmul.f32 %v476, %v510
          %v516 = vmul.f32 %v479, %v510
          %v517 = vmul.f32 %v482, %v510
          %v518 = vmul.f32 %v485, %v510
          %v519 = vmul.f32 %v488, %v510
          %v520 = vmul.f32 %v491, %v510
          %v521 = vmul.f32 %v494, %v510
          %v522 = vmul.f32 %v497, %v510
          %v523 = vmul.f32 %v500, %v510
          %v524 = vmul.f32 %v503, %v510
          %v525 = vmul.f32 %v506, %v510
          %v526 = vmul.f32 %v509, %v510
          %v527 = vadd.f32 %v511, 1e-06
          %v528 = vadd.f32 %v512, 1e-06
          %v529 = vadd.f32 %v513, 1e-06
          %v530 = vadd.f32 %v514, 1e-06
          %v531 = vadd.f32 %v515, 1e-06
          %v532 = vadd.f32 %v516, 1e-06
          %v533 = vadd.f32 %v517, 1e-06
          %v534 = vadd.f32 %v518, 1e-06
          %v535 = vadd.f32 %v519, 1e-06
          %v536 = vadd.f32 %v520, 1e-06
          %v537 = vadd.f32 %v521, 1e-06
          %v538 = vadd.f32 %v522, 1e-06
          %v539 = vadd.f32 %v523, 1e-06
          %v540 = vadd.f32 %v524, 1e-06
          %v541 = vadd.f32 %v525, 1e-06
          %v542 = vadd.f32 %v526, 1e-06
          %v543 = vrsqrt.pop %v527
          %v544 = vrsqrt.pop %v528
          %v545 = vrsqrt.pop %v529
          %v546 = vrsqrt.pop %v530
          %v547 = vrsqrt.pop %v531
          %v548 = vrsqrt.pop %v532
          %v549 = vrsqrt.pop %v533
          %v550 = vrsqrt.pop %v534
          %v551 = vrsqrt.pop %v535
          %v552 = vrsqrt.pop %v536
          %v553 = vrsqrt.pop %v537
          %v554 = vrsqrt.pop %v538
          %v555 = vrsqrt.pop %v539
          %v556 = vrsqrt.pop %v540
          %v557 = vrsqrt.pop %v541
          %v558 = vrsqrt.pop %v542
          %v559 = vmul.f32 %v398, %v543
          %v560 = vmul.f32 %v399, %v543
          %v561 = vmul.f32 %v400, %v544
          %v562 = vmul.f32 %v401, %v544
          %v563 = vmul.f32 %v402, %v545
          %v564 = vmul.f32 %v403, %v545
          %v565 = vmul.f32 %v404, %v546
          %v566 = vmul.f32 %v405, %v546
          %v567 = vmul.f32 %v406, %v547
          %v568 = vmul.f32 %v407, %v547
          %v569 = vmul.f32 %v408, %v548
          %v570 = vmul.f32 %v409, %v548
          %v571 = vmul.f32 %v410, %v549
          %v572 = vmul.f32 %v411, %v549
          %v573 = vmul.f32 %v412, %v550
          %v574 = vmul.f32 %v413, %v550
          %v575 = vmul.f32 %v414, %v551
          %v576 = vmul.f32 %v415, %v551
          %v577 = vmul.f32 %v416, %v552
          %v578 = vmul.f32 %v417, %v552
          %v579 = vmul.f32 %v418, %v553
          %v580 = vmul.f32 %v419, %v553
          %v581 = vmul.f32 %v420, %v554
          %v582 = vmul.f32 %v421, %v554
          %v583 = vmul.f32 %v422, %v555
          %v584 = vmul.f32 %v423, %v555
          %v585 = vmul.f32 %v424, %v556
          %v586 = vmul.f32 %v425, %v556
          %v587 = vmul.f32 %v426, %v557
          %v588 = vmul.f32 %v427, %v557
          %v589 = vmul.f32 %v428, %v558
          %v590 = vmul.f32 %v429, %v558
          %v591 = vld [vmem:[%s1] sm:$0x3]
          %v593 = vlaneseq
          %v594 = vshrl.u32 %v593, 7
          %v595 = vsub.s32 0, %v594
          %v596 = vrot.slane %v591, %v595
          %v597 = vlaneseq
          %v598 = vshrl.u32 %v597, 7
          %v599 = vsub.s32 1, %v598
          %v600 = vrot.slane %v591, %v599
          %v603 = vmul.f32 %v559, %v596
          %v604 = vmul.f32 %v560, %v600
          %v605 = vmul.f32 %v561, %v596
          %v606 = vmul.f32 %v562, %v600
          %v607 = vmul.f32 %v563, %v596
          %v608 = vmul.f32 %v564, %v600
          %v609 = vmul.f32 %v565, %v596
          %v610 = vmul.f32 %v566, %v600
          %v611 = vmul.f32 %v567, %v596
          %v612 = vmul.f32 %v568, %v600
          %v613 = vmul.f32 %v569, %v596
          %v614 = vmul.f32 %v570, %v600
          %v615 = vmul.f32 %v571, %v596
          %v616 = vmul.f32 %v572, %v600
          %v617 = vmul.f32 %v573, %v596
          %v618 = vmul.f32 %v574, %v600
          %v619 = vmul.f32 %v575, %v596
          %v620 = vmul.f32 %v576, %v600
          %v621 = vmul.f32 %v577, %v596
          %v622 = vmul.f32 %v578, %v600
          %v623 = vmul.f32 %v579, %v596
          %v624 = vmul.f32 %v580, %v600
          %v625 = vmul.f32 %v581, %v596
          %v626 = vmul.f32 %v582, %v600
          %v627 = vmul.f32 %v583, %v596
          %v628 = vmul.f32 %v584, %v600
          %v629 = vmul.f32 %v585, %v596
          %v630 = vmul.f32 %v586, %v600
          %v631 = vmul.f32 %v587, %v596
          %v632 = vmul.f32 %v588, %v600
          %v633 = vmul.f32 %v589, %v596
          %v634 = vmul.f32 %v590, %v600
          %v635 = vpack.c.bf16 %v605, %v603
          %v636 = vpack.c.bf16 %v606, %v604
          %v637 = vpack.c.bf16 %v609, %v607
          %v638 = vpack.c.bf16 %v610, %v608
          %v639 = vpack.c.bf16 %v613, %v611
          %v640 = vpack.c.bf16 %v614, %v612
          %v641 = vpack.c.bf16 %v617, %v615
          %v642 = vpack.c.bf16 %v618, %v616
          %v643 = vpack.c.bf16 %v621, %v619
          %v644 = vpack.c.bf16 %v622, %v620
          %v645 = vpack.c.bf16 %v625, %v623
          %v646 = vpack.c.bf16 %v626, %v624
          %v647 = vpack.c.bf16 %v629, %v627
          %v648 = vpack.c.bf16 %v630, %v628
          %v649 = vpack.c.bf16 %v633, %v631
          %v650 = vpack.c.bf16 %v634, %v632
          %651 = vst [vmem:[#allocation2] sm:$0xff] %v635
          %652 = vst [vmem:[#allocation2 + $0x8] sm:$0xff] %v636
          %653 = vst [vmem:[#allocation2 + $0x10] sm:$0xff] %v637
          %654 = vst [vmem:[#allocation2 + $0x18] sm:$0xff] %v638
          %655 = vst [vmem:[#allocation2 + $0x20] sm:$0xff] %v639
          %656 = vst [vmem:[#allocation2 + $0x28] sm:$0xff] %v640
          %657 = vst [vmem:[#allocation2 + $0x30] sm:$0xff] %v641
          %658 = vst [vmem:[#allocation2 + $0x38] sm:$0xff] %v642
          %659 = vst [vmem:[#allocation2 + $0x40] sm:$0xff] %v643
          %660 = vst [vmem:[#allocation2 + $0x48] sm:$0xff] %v644
          %661 = vst [vmem:[#allocation2 + $0x50] sm:$0xff] %v645
          %662 = vst [vmem:[#allocation2 + $0x58] sm:$0xff] %v646
          %663 = vst [vmem:[#allocation2 + $0x60] sm:$0xff] %v647
          %664 = vst [vmem:[#allocation2 + $0x68] sm:$0xff] %v648
          %665 = vst [vmem:[#allocation2 + $0x70] sm:$0xff] %v649
          %666 = vst [vmem:[#allocation2 + $0x78] sm:$0xff] %v650
        $region64: #{tpu_custom_call.1} parent=43 // pred_fallthru
          _
        %v667 = vld [vmem:[#allocation2] sm:$0xff]
        %v668 = vld [vmem:[#allocation2 + $0x8] sm:$0xff]
        %v669 = vld [vmem:[#allocation2 + $0x10] sm:$0xff]
        %v670 = vld [vmem:[#allocation2 + $0x18] sm:$0xff]
        %v671 = vld [vmem:[#allocation2 + $0x20] sm:$0xff]
        %v672 = vld [vmem:[#allocation2 + $0x28] sm:$0xff]
        %v673 = vld [vmem:[#allocation2 + $0x30] sm:$0xff]
        %v674 = vld [vmem:[#allocation2 + $0x38] sm:$0xff]
        %v675 = vld [vmem:[#allocation2 + $0x40] sm:$0xff]
        %v676 = vld [vmem:[#allocation2 + $0x48] sm:$0xff]
        %v677 = vld [vmem:[#allocation2 + $0x50] sm:$0xff]
        %v678 = vld [vmem:[#allocation2 + $0x58] sm:$0xff]
        %v679 = vld [vmem:[#allocation2 + $0x60] sm:$0xff]
        %v680 = vld [vmem:[#allocation2 + $0x68] sm:$0xff]
        %v681 = vld [vmem:[#allocation2 + $0x70] sm:$0xff]
        %v682 = vld [vmem:[#allocation2 + $0x78] sm:$0xff]
        %v683 = vld [vmem:[%s326] sm:$0xff]
        %v684 = vld [vmem:[%s326 + $0x8] sm:$0xff]
        %v685 = vld [vmem:[%s326 + $0x10] sm:$0xff]
        %v686 = vld [vmem:[%s326 + $0x18] sm:$0xff]
        %v687 = vld [vmem:[%s326 + $0x20] sm:$0xff]
        %v688 = vld [vmem:[%s326 + $0x28] sm:$0xff]
        %v689 = vld [vmem:[%s326 + $0x30] sm:$0xff]
        %v690 = vld [vmem:[%s326 + $0x38] sm:$0xff]
        %v691 = vld [vmem:[%s326 + $0x40] sm:$0xff]
        %v692 = vld [vmem:[%s326 + $0x48] sm:$0xff]
        %v693 = vld [vmem:[%s326 + $0x50] sm:$0xff]
        %v694 = vld [vmem:[%s326 + $0x58] sm:$0xff]
        %v695 = vld [vmem:[%s326 + $0x60] sm:$0xff]
        %v696 = vld [vmem:[%s326 + $0x68] sm:$0xff]
        %v697 = vld [vmem:[%s326 + $0x70] sm:$0xff]
        %v698 = vld [vmem:[%s326 + $0x78] sm:$0xff]
        %v699 = vld [vmem:[%s326 + $0x80] sm:$0xff]
        %v700 = vld [vmem:[%s326 + $0x88] sm:$0xff]
        %v701 = vld [vmem:[%s326 + $0x90] sm:$0xff]
        %v702 = vld [vmem:[%s326 + $0x98] sm:$0xff]
        %v703 = vld [vmem:[%s326 + $0xa0] sm:$0xff]
        %v704 = vld [vmem:[%s326 + $0xa8] sm:$0xff]
        %v705 = vld [vmem:[%s326 + $0xb0] sm:$0xff]
        %v706 = vld [vmem:[%s326 + $0xb8] sm:$0xff]
        %v707 = vld [vmem:[%s326 + $0xc0] sm:$0xff]
        %v708 = vld [vmem:[%s326 + $0xc8] sm:$0xff]
        %v709 = vld [vmem:[%s326 + $0xd0] sm:$0xff]
        %v710 = vld [vmem:[%s326 + $0xd8] sm:$0xff]
        %v711 = vld [vmem:[%s326 + $0xe0] sm:$0xff]
        %v712 = vld [vmem:[%s326 + $0xe8] sm:$0xff]
        %v713 = vld [vmem:[%s326 + $0xf0] sm:$0xff]
        %v714 = vld [vmem:[%s326 + $0xf8] sm:$0xff]
        %v715 = vld [vmem:[%s372] sm:$0x3]
        %v716 = vunpack.c.l.bf16 %v715
        %v718 = vlaneseq
        %v719 = vshrl.u32 %v718, 7
        %v720 = vsub.s32 0, %v719
        %v721 = vrot.slane %v716, %v720
        %v722 = vlaneseq
        %v723 = vshrl.u32 %v722, 7
        %v724 = vsub.s32 2, %v723
        %v725 = vrot.slane %v716, %v724
        %v728 = vlaneseq
        %v729 = vshrl.u32 %v728, 7
        %v730 = vsub.s32 0, %v729
        %v731 = vrot.slane %v721, %v730
        %v732 = vlaneseq
        %v733 = vshrl.u32 %v732, 7
        %v734 = vsub.s32 0, %v733
        %v735 = vrot.slane %v725, %v734
        %v768 = vunpack.c.l.b16 %v683
        %v769 = vunpack.c.h.b16 %v683
        %v770 = vunpack.c.l.b16 %v684
        %v771 = vunpack.c.h.b16 %v684
        %v772 = vunpack.c.l.b16 %v685
        %v773 = vunpack.c.h.b16 %v685
        %v774 = vunpack.c.l.b16 %v686
        %v775 = vunpack.c.h.b16 %v686
        %v776 = vunpack.c.l.b16 %v687
        %v777 = vunpack.c.h.b16 %v687
        %v778 = vunpack.c.l.b16 %v688
        %v779 = vunpack.c.h.b16 %v688
        %v780 = vunpack.c.l.b16 %v689
        %v781 = vunpack.c.h.b16 %v689
        %v782 = vunpack.c.l.b16 %v690
        %v783 = vunpack.c.h.b16 %v690
        %v784 = vunpack.c.l.b16 %v691
        %v785 = vunpack.c.h.b16 %v691
        %v786 = vunpack.c.l.b16 %v692
        %v787 = vunpack.c.h.b16 %v692
        %v788 = vunpack.c.l.b16 %v693
        %v789 = vunpack.c.h.b16 %v693
        %v790 = vunpack.c.l.b16 %v694
        %v791 = vunpack.c.h.b16 %v694
        %v792 = vunpack.c.l.b16 %v695
        %v793 = vunpack.c.h.b16 %v695
        %v794 = vunpack.c.l.b16 %v696
        %v795 = vunpack.c.h.b16 %v696
        %v796 = vunpack.c.l.b16 %v697
        %v797 = vunpack.c.h.b16 %v697
        %v798 = vunpack.c.l.b16 %v698
        %v799 = vunpack.c.h.b16 %v698
        %v800 = vunpack.c.l.b16 %v699
        %v801 = vunpack.c.h.b16 %v699
        %v802 = vunpack.c.l.b16 %v700
        %v803 = vunpack.c.h.b16 %v700
        %v804 = vunpack.c.l.b16 %v701
        %v805 = vunpack.c.h.b16 %v701
        %v806 = vunpack.c.l.b16 %v702
        %v807 = vunpack.c.h.b16 %v702
        %v808 = vunpack.c.l.b16 %v703
        %v809 = vunpack.c.h.b16 %v703
        %v810 = vunpack.c.l.b16 %v704
        %v811 = vunpack.c.h.b16 %v704
        %v812 = vunpack.c.l.b16 %v705
        %v813 = vunpack.c.h.b16 %v705
        %v814 = vunpack.c.l.b16 %v706
        %v815 = vunpack.c.h.b16 %v706
        %v816 = vunpack.c.l.b16 %v707
        %v817 = vunpack.c.h.b16 %v707
        %v818 = vunpack.c.l.b16 %v708
        %v819 = vunpack.c.h.b16 %v708
        %v820 = vunpack.c.l.b16 %v709
        %v821 = vunpack.c.h.b16 %v709
        %v822 = vunpack.c.l.b16 %v710
        %v823 = vunpack.c.h.b16 %v710
        %v824 = vunpack.c.l.b16 %v711
        %v825 = vunpack.c.h.b16 %v711
        %v826 = vunpack.c.l.b16 %v712
        %v827 = vunpack.c.h.b16 %v712
        %v828 = vunpack.c.l.b16 %v713
        %v829 = vunpack.c.h.b16 %v713
        %v830 = vunpack.c.l.b16 %v714
        %v831 = vunpack.c.h.b16 %v714
        %v832 = vpack.c.b16 %v770, %v768
        %v833 = vpack.c.b16 %v771, %v769
        %v834 = vpack.c.b16 %v774, %v772
        %v835 = vpack.c.b16 %v775, %v773
        %v836 = vpack.c.b16 %v778, %v776
        %v837 = vpack.c.b16 %v779, %v777
        %v838 = vpack.c.b16 %v782, %v780
        %v839 = vpack.c.b16 %v783, %v781
        %v840 = vpack.c.b16 %v786, %v784
        %v841 = vpack.c.b16 %v787, %v785
        %v842 = vpack.c.b16 %v790, %v788
        %v843 = vpack.c.b16 %v791, %v789
        %v844 = vpack.c.b16 %v794, %v792
        %v845 = vpack.c.b16 %v795, %v793
        %v846 = vpack.c.b16 %v798, %v796
        %v847 = vpack.c.b16 %v799, %v797
        %v848 = vpack.c.b16 %v802, %v800
        %v849 = vpack.c.b16 %v803, %v801
        %v850 = vpack.c.b16 %v806, %v804
        %v851 = vpack.c.b16 %v807, %v805
        %v852 = vpack.c.b16 %v810, %v808
        %v853 = vpack.c.b16 %v811, %v809
        %v854 = vpack.c.b16 %v814, %v812
        %v855 = vpack.c.b16 %v815, %v813
        %v856 = vpack.c.b16 %v818, %v816
        %v857 = vpack.c.b16 %v819, %v817
        %v858 = vpack.c.b16 %v822, %v820
        %v859 = vpack.c.b16 %v823, %v821
        %v860 = vpack.c.b16 %v826, %v824
        %v861 = vpack.c.b16 %v827, %v825
        %v862 = vpack.c.b16 %v830, %v828
        %v863 = vpack.c.b16 %v831, %v829
        %896 = vmatprep.subr.bf16.mxu0 %v833
        %897 = vmatpush1.bf16.msra.mxu0 %v832
        %898 = vmatprep.subr.bf16.mxu0 %v835
        %899 = vmatpush1.bf16.msra.mxu0 %v834
        %900 = vmatprep.subr.bf16.mxu0 %v837
        %901 = vmatpush1.bf16.msra.mxu0 %v836
        %902 = vmatprep.subr.bf16.mxu0 %v839
        %903 = vmatpush1.bf16.msra.mxu0 %v838
        %904 = vmatprep.subr.bf16.mxu0 %v841
        %905 = vmatpush1.bf16.msra.mxu0 %v840
        %906 = vmatprep.subr.bf16.mxu0 %v843
        %907 = vmatpush1.bf16.msra.mxu0 %v842
        %908 = vmatprep.subr.bf16.mxu0 %v845
        %909 = vmatpush1.bf16.msra.mxu0 %v844
        %910 = vmatprep.subr.bf16.mxu0 %v847
        %911 = vmatpush1.bf16.msra.mxu0 %v846
        %912 = vmatprep.subr.bf16.mxu0 %v849
        %913 = vmatpush1.bf16.msra.mxu0 %v848
        %914 = vmatprep.subr.bf16.mxu0 %v851
        %915 = vmatpush1.bf16.msra.mxu0 %v850
        %916 = vmatprep.subr.bf16.mxu0 %v853
        %917 = vmatpush1.bf16.msra.mxu0 %v852
        %918 = vmatprep.subr.bf16.mxu0 %v855
        %919 = vmatpush1.bf16.msra.mxu0 %v854
        %920 = vmatprep.subr.bf16.mxu0 %v857
        %921 = vmatpush1.bf16.msra.mxu0 %v856
        %922 = vmatprep.subr.bf16.mxu0 %v859
        %923 = vmatpush1.bf16.msra.mxu0 %v858
        %924 = vmatprep.subr.bf16.mxu0 %v861
        %925 = vmatpush1.bf16.msra.mxu0 %v860
        %926 = vmatprep.subr.bf16.mxu0 %v863
        %927 = vmatpush1.bf16.msra.mxu0 %v862
        %928 = vmatprep.mubr.bf16.mxu0 %v668
        %929 = vmatmul.mubr.bf16.gmra.mrb[0].mxu0 %v667
        %v930 = vpop.f32.mrb[0].mxu0
        %v931 = vadd.f32 %v731, %v930
        %v932 = vpop.f32.mrb[0].mxu0
        %v933 = vadd.f32 %v735, %v932
        %v934 = vpop.f32.mrb[0].mxu0
        %v935 = vadd.f32 %v731, %v934
        %v936 = vpop.f32.mrb[0].mxu0
        %v937 = vadd.f32 %v735, %v936
        %938 = vmatprep.mubr.bf16.mxu0 %v670
        %939 = vmatmul.mubr.bf16.gmra.mrb[0].mxu0 %v669
        %v940 = vpop.f32.mrb[0].mxu0
        %v941 = vadd.f32 %v731, %v940
        %v942 = vpop.f32.mrb[0].mxu0
        %v943 = vadd.f32 %v735, %v942
        %v944 = vpop.f32.mrb[0].mxu0
        %v945 = vadd.f32 %v731, %v944
        %v946 = vpop.f32.mrb[0].mxu0
        %v947 = vadd.f32 %v735, %v946
        %948 = vmatprep.mubr.bf16.mxu0 %v672
        %949 = vmatmul.mubr.bf16.gmra.mrb[0].mxu0 %v671
        %v950 = vpop.f32.mrb[0].mxu0
        %v951 = vadd.f32 %v731, %v950
        %v952 = vpop.f32.mrb[0].mxu0
        %v953 = vadd.f32 %v735, %v952
        %v954 = vpop.f32.mrb[0].mxu0
        %v955 = vadd.f32 %v731, %v954
        %v956 = vpop.f32.mrb[0].mxu0
        %v957 = vadd.f32 %v735, %v956
        %958 = vmatprep.mubr.bf16.mxu0 %v674
        %959 = vmatmul.mubr.bf16.gmra.mrb[0].mxu0 %v673
        %v960 = vpop.f32.mrb[0].mxu0
        %v961 = vadd.f32 %v731, %v960
        %v962 = vpop.f32.mrb[0].mxu0
        %v963 = vadd.f32 %v735, %v962
        %v964 = vpop.f32.mrb[0].mxu0
        %v965 = vadd.f32 %v731, %v964
        %v966 = vpop.f32.mrb[0].mxu0
        %v967 = vadd.f32 %v735, %v966
        %968 = vmatprep.mubr.bf16.mxu0 %v676
        %969 = vmatmul.mubr.bf16.gmra.mrb[0].mxu0 %v675
        %v970 = vpop.f32.mrb[0].mxu0
        %v971 = vadd.f32 %v731, %v970
        %v972 = vpop.f32.mrb[0].mxu0
        %v973 = vadd.f32 %v735, %v972
        %v974 = vpop.f32.mrb[0].mxu0
        %v975 = vadd.f32 %v731, %v974
        %v976 = vpop.f32.mrb[0].mxu0
        %v977 = vadd.f32 %v735, %v976
        %978 = vmatprep.mubr.bf16.mxu0 %v678
        %979 = vmatmul.mubr.bf16.gmra.mrb[0].mxu0 %v677
        %v980 = vpop.f32.mrb[0].mxu0
        %v981 = vadd.f32 %v731, %v980
        %v982 = vpop.f32.mrb[0].mxu0
        %v983 = vadd.f32 %v735, %v982
        %v984 = vpop.f32.mrb[0].mxu0
        %v985 = vadd.f32 %v731, %v984
        %v986 = vpop.f32.mrb[0].mxu0
        %v987 = vadd.f32 %v735, %v986
        %988 = vmatprep.mubr.bf16.mxu0 %v680
        %989 = vmatmul.mubr.bf16.gmra.mrb[0].mxu0 %v679
        %v990 = vpop.f32.mrb[0].mxu0
        %v991 = vadd.f32 %v731, %v990
        %v992 = vpop.f32.mrb[0].mxu0
        %v993 = vadd.f32 %v735, %v992
        %v994 = vpop.f32.mrb[0].mxu0
        %v995 = vadd.f32 %v731, %v994
        %v996 = vpop.f32.mrb[0].mxu0
        %v997 = vadd.f32 %v735, %v996
        %998 = vmatprep.mubr.bf16.mxu0 %v682
        %999 = vmatmul.mubr.bf16.gmra.mrb[0].mxu0 %v681
        %v1000 = vpop.f32.mrb[0].mxu0
        %v1001 = vadd.f32 %v731, %v1000
        %v1002 = vpop.f32.mrb[0].mxu0
        %v1003 = vadd.f32 %v735, %v1002
        %v1004 = vpop.f32.mrb[0].mxu0
        %v1005 = vadd.f32 %v731, %v1004
        %v1006 = vpop.f32.mrb[0].mxu0
        %v1007 = vadd.f32 %v735, %v1006
        %1008 = vdwg.mxu0
        %v1009 = vld [vmem:[#allocation8] sm:$0xff]
        %v1010 = vld [vmem:[#allocation8 + $0x8] sm:$0xff]
        %v1011 = vld [vmem:[#allocation8 + $0x10] sm:$0xff]
        %v1012 = vld [vmem:[#allocation8 + $0x18] sm:$0xff]
        %v1013 = vld [vmem:[#allocation8 + $0x20] sm:$0xff]
        %v1014 = vld [vmem:[#allocation8 + $0x28] sm:$0xff]
        %v1015 = vld [vmem:[#allocation8 + $0x30] sm:$0xff]
        %v1016 = vld [vmem:[#allocation8 + $0x38] sm:$0xff]
        %v1017 = vld [vmem:[#allocation8 + $0x40] sm:$0xff]
        %v1018 = vld [vmem:[#allocation8 + $0x48] sm:$0xff]
        %v1019 = vld [vmem:[#allocation8 + $0x50] sm:$0xff]
        %v1020 = vld [vmem:[#allocation8 + $0x58] sm:$0xff]
        %v1021 = vld [vmem:[#allocation8 + $0x60] sm:$0xff]
        %v1022 = vld [vmem:[#allocation8 + $0x68] sm:$0xff]
        %v1023 = vld [vmem:[#allocation8 + $0x70] sm:$0xff]
        %v1024 = vld [vmem:[#allocation8 + $0x78] sm:$0xff]
        %v1025 = vld [vmem:[#allocation9] sm:$0xff]
        %v1026 = vld [vmem:[#allocation9 + $0x8] sm:$0xff]
        %v1027 = vld [vmem:[#allocation9 + $0x10] sm:$0xff]
        %v1028 = vld [vmem:[#allocation9 + $0x18] sm:$0xff]
        %v1029 = vld [vmem:[#allocation9 + $0x20] sm:$0xff]
        %v1030 = vld [vmem:[#allocation9 + $0x28] sm:$0xff]
        %v1031 = vld [vmem:[#allocation9 + $0x30] sm:$0xff]
        %v1032 = vld [vmem:[#allocation9 + $0x38] sm:$0xff]
        %v1033 = vld [vmem:[#allocation9 + $0x40] sm:$0xff]
        %v1034 = vld [vmem:[#allocation9 + $0x48] sm:$0xff]
        %v1035 = vld [vmem:[#allocation9 + $0x50] sm:$0xff]
        %v1036 = vld [vmem:[#allocation9 + $0x58] sm:$0xff]
        %v1037 = vld [vmem:[#allocation9 + $0x60] sm:$0xff]
        %v1038 = vld [vmem:[#allocation9 + $0x68] sm:$0xff]
        %v1039 = vld [vmem:[#allocation9 + $0x70] sm:$0xff]
        %v1040 = vld [vmem:[#allocation9 + $0x78] sm:$0xff]
        %s1041 = smul.u32 %s30, 256
        %p1042 = scmp.lt.s32.totalorder %s1041, 512
        // Predicated region
        $region65: #{tpu_custom_call.1} parent=43 // pred_check
          %p1043 = pneg %p1042
        $region66: #{tpu_custom_call.1} parent=43 // pred_check_branch
          %1045 = sbr.rel (%p1043) target = $region68
        $region67: #{tpu_custom_call.1} parent=43 // pred_region
          %1062 = vrot.lane.b32.xlu0 %v931, 64
          %v1063 = vpop.permute.xlu0 %1062
          %1064 = vrot.lane.b32.xlu0 %v935, 64
          %v1065 = vpop.permute.xlu0 %1064
          %1066 = vrot.lane.b32.xlu0 %v941, 64
          %v1067 = vpop.permute.xlu0 %1066
          %1068 = vrot.lane.b32.xlu0 %v945, 64
          %v1069 = vpop.permute.xlu0 %1068
          %1070 = vrot.lane.b32.xlu0 %v951, 64
          %v1071 = vpop.permute.xlu0 %1070
          %1072 = vrot.lane.b32.xlu0 %v955, 64
          %v1073 = vpop.permute.xlu0 %1072
          %1074 = vrot.lane.b32.xlu0 %v961, 64
          %v1075 = vpop.permute.xlu0 %1074
          %1076 = vrot.lane.b32.xlu0 %v965, 64
          %v1077 = vpop.permute.xlu0 %1076
          %1078 = vrot.lane.b32.xlu0 %v971, 64
          %v1079 = vpop.permute.xlu0 %1078
          %1080 = vrot.lane.b32.xlu0 %v975, 64
          %v1081 = vpop.permute.xlu0 %1080
          %1082 = vrot.lane.b32.xlu0 %v981, 64
          %v1083 = vpop.permute.xlu0 %1082
          %1084 = vrot.lane.b32.xlu0 %v985, 64
          %v1085 = vpop.permute.xlu0 %1084
          %1086 = vrot.lane.b32.xlu0 %v991, 64
          %v1087 = vpop.permute.xlu0 %1086
          %1088 = vrot.lane.b32.xlu0 %v995, 64
          %v1089 = vpop.permute.xlu0 %1088
          %1090 = vrot.lane.b32.xlu0 %v1001, 64
          %v1091 = vpop.permute.xlu0 %1090
          %1092 = vrot.lane.b32.xlu0 %v1005, 64
          %v1093 = vpop.permute.xlu0 %1092
          %v1110 = vmul.f32 %v931, %v1009
          %v1111 = vmul.f32 %v935, %v1010
          %v1112 = vmul.f32 %v941, %v1011
          %v1113 = vmul.f32 %v945, %v1012
          %v1114 = vmul.f32 %v951, %v1013
          %v1115 = vmul.f32 %v955, %v1014
          %v1116 = vmul.f32 %v961, %v1015
          %v1117 = vmul.f32 %v965, %v1016
          %v1118 = vmul.f32 %v971, %v1017
          %v1119 = vmul.f32 %v975, %v1018
          %v1120 = vmul.f32 %v981, %v1019
          %v1121 = vmul.f32 %v985, %v1020
          %v1122 = vmul.f32 %v991, %v1021
          %v1123 = vmul.f32 %v995, %v1022
          %v1124 = vmul.f32 %v1001, %v1023
          %v1125 = vmul.f32 %v1005, %v1024
          %v1126 = vmul.f32 %v1063, %v1025
          %v1127 = vmul.f32 %v1065, %v1026
          %v1128 = vmul.f32 %v1067, %v1027
          %v1129 = vmul.f32 %v1069, %v1028
          %v1130 = vmul.f32 %v1071, %v1029
          %v1131 = vmul.f32 %v1073, %v1030
          %v1132 = vmul.f32 %v1075, %v1031
          %v1133 = vmul.f32 %v1077, %v1032
          %v1134 = vmul.f32 %v1079, %v1033
          %v1135 = vmul.f32 %v1081, %v1034
          %v1136 = vmul.f32 %v1083, %v1035
          %v1137 = vmul.f32 %v1085, %v1036
          %v1138 = vmul.f32 %v1087, %v1037
          %v1139 = vmul.f32 %v1089, %v1038
          %v1140 = vmul.f32 %v1091, %v1039
          %v1141 = vmul.f32 %v1093, %v1040
          %v1142 = vadd.f32 %v1110, %v1126
          %v1143 = vadd.f32 %v1111, %v1127
          %v1144 = vadd.f32 %v1112, %v1128
          %v1145 = vadd.f32 %v1113, %v1129
          %v1146 = vadd.f32 %v1114, %v1130
          %v1147 = vadd.f32 %v1115, %v1131
          %v1148 = vadd.f32 %v1116, %v1132
          %v1149 = vadd.f32 %v1117, %v1133
          %v1150 = vadd.f32 %v1118, %v1134
          %v1151 = vadd.f32 %v1119, %v1135
          %v1152 = vadd.f32 %v1120, %v1136
          %v1153 = vadd.f32 %v1121, %v1137
          %v1154 = vadd.f32 %v1122, %v1138
          %v1155 = vadd.f32 %v1123, %v1139
          %v1156 = vadd.f32 %v1124, %v1140
          %v1157 = vadd.f32 %v1125, %v1141
          %1174 = vrot.lane.b32.xlu0 %v933, 64
          %v1175 = vpop.permute.xlu0 %1174
          %1176 = vrot.lane.b32.xlu0 %v937, 64
          %v1177 = vpop.permute.xlu0 %1176
          %1178 = vrot.lane.b32.xlu0 %v943, 64
          %v1179 = vpop.permute.xlu0 %1178
          %1180 = vrot.lane.b32.xlu0 %v947, 64
          %v1181 = vpop.permute.xlu0 %1180
          %1182 = vrot.lane.b32.xlu0 %v953, 64
          %v1183 = vpop.permute.xlu0 %1182
          %1184 = vrot.lane.b32.xlu0 %v957, 64
          %v1185 = vpop.permute.xlu0 %1184
          %1186 = vrot.lane.b32.xlu0 %v963, 64
          %v1187 = vpop.permute.xlu0 %1186
          %1188 = vrot.lane.b32.xlu0 %v967, 64
          %v1189 = vpop.permute.xlu0 %1188
          %1190 = vrot.lane.b32.xlu0 %v973, 64
          %v1191 = vpop.permute.xlu0 %1190
          %1192 = vrot.lane.b32.xlu0 %v977, 64
          %v1193 = vpop.permute.xlu0 %1192
          %1194 = vrot.lane.b32.xlu0 %v983, 64
          %v1195 = vpop.permute.xlu0 %1194
          %1196 = vrot.lane.b32.xlu0 %v987, 64
          %v1197 = vpop.permute.xlu0 %1196
          %1198 = vrot.lane.b32.xlu0 %v993, 64
          %v1199 = vpop.permute.xlu0 %1198
          %1200 = vrot.lane.b32.xlu0 %v997, 64
          %v1201 = vpop.permute.xlu0 %1200
          %1202 = vrot.lane.b32.xlu0 %v1003, 64
          %v1203 = vpop.permute.xlu0 %1202
          %1204 = vrot.lane.b32.xlu0 %v1007, 64
          %v1205 = vpop.permute.xlu0 %1204
          %v1222 = vmul.f32 %v933, %v1009
          %v1223 = vmul.f32 %v937, %v1010
          %v1224 = vmul.f32 %v943, %v1011
          %v1225 = vmul.f32 %v947, %v1012
          %v1226 = vmul.f32 %v953, %v1013
          %v1227 = vmul.f32 %v957, %v1014
          %v1228 = vmul.f32 %v963, %v1015
          %v1229 = vmul.f32 %v967, %v1016
          %v1230 = vmul.f32 %v973, %v1017
          %v1231 = vmul.f32 %v977, %v1018
          %v1232 = vmul.f32 %v983, %v1019
          %v1233 = vmul.f32 %v987, %v1020
          %v1234 = vmul.f32 %v993, %v1021
          %v1235 = vmul.f32 %v997, %v1022
          %v1236 = vmul.f32 %v1003, %v1023
          %v1237 = vmul.f32 %v1007, %v1024
          %v1238 = vmul.f32 %v1175, %v1025
          %v1239 = vmul.f32 %v1177, %v1026
          %v1240 = vmul.f32 %v1179, %v1027
          %v1241 = vmul.f32 %v1181, %v1028
          %v1242 = vmul.f32 %v1183, %v1029
          %v1243 = vmul.f32 %v1185, %v1030
          %v1244 = vmul.f32 %v1187, %v1031
          %v1245 = vmul.f32 %v1189, %v1032
          %v1246 = vmul.f32 %v1191, %v1033
          %v1247 = vmul.f32 %v1193, %v1034
          %v1248 = vmul.f32 %v1195, %v1035
          %v1249 = vmul.f32 %v1197, %v1036
          %v1250 = vmul.f32 %v1199, %v1037
          %v1251 = vmul.f32 %v1201, %v1038
          %v1252 = vmul.f32 %v1203, %v1039
          %v1253 = vmul.f32 %v1205, %v1040
          %v1254 = vadd.f32 %v1222, %v1238
          %v1255 = vadd.f32 %v1223, %v1239
          %v1256 = vadd.f32 %v1224, %v1240
          %v1257 = vadd.f32 %v1225, %v1241
          %v1258 = vadd.f32 %v1226, %v1242
          %v1259 = vadd.f32 %v1227, %v1243
          %v1260 = vadd.f32 %v1228, %v1244
          %v1261 = vadd.f32 %v1229, %v1245
          %v1262 = vadd.f32 %v1230, %v1246
          %v1263 = vadd.f32 %v1231, %v1247
          %v1264 = vadd.f32 %v1232, %v1248
          %v1265 = vadd.f32 %v1233, %v1249
          %v1266 = vadd.f32 %v1234, %v1250
          %v1267 = vadd.f32 %v1235, %v1251
          %v1268 = vadd.f32 %v1236, %v1252
          %v1269 = vadd.f32 %v1237, %v1253
          %v1270 = vpack.c.bf16 %v1143, %v1142
          %v1271 = vpack.c.bf16 %v1255, %v1254
          %v1272 = vpack.c.bf16 %v1145, %v1144
          %v1273 = vpack.c.bf16 %v1257, %v1256
          %v1274 = vpack.c.bf16 %v1147, %v1146
          %v1275 = vpack.c.bf16 %v1259, %v1258
          %v1276 = vpack.c.bf16 %v1149, %v1148
          %v1277 = vpack.c.bf16 %v1261, %v1260
          %v1278 = vpack.c.bf16 %v1151, %v1150
          %v1279 = vpack.c.bf16 %v1263, %v1262
          %v1280 = vpack.c.bf16 %v1153, %v1152
          %v1281 = vpack.c.bf16 %v1265, %v1264
          %v1282 = vpack.c.bf16 %v1155, %v1154
          %v1283 = vpack.c.bf16 %v1267, %v1266
          %v1284 = vpack.c.bf16 %v1157, %v1156
          %v1285 = vpack.c.bf16 %v1269, %v1268
          %v1302 = vunpack.c.l.b16 %v1270
          %v1303 = vunpack.c.l.b16 %v1271
          %v1304 = vunpack.c.h.b16 %v1270
          %v1305 = vunpack.c.h.b16 %v1271
          %v1306 = vunpack.c.l.b16 %v1272
          %v1307 = vunpack.c.l.b16 %v1273
          %v1308 = vunpack.c.h.b16 %v1272
          %v1309 = vunpack.c.h.b16 %v1273
          %v1310 = vunpack.c.l.b16 %v1274
          %v1311 = vunpack.c.l.b16 %v1275
          %v1312 = vunpack.c.h.b16 %v1274
          %v1313 = vunpack.c.h.b16 %v1275
          %v1314 = vunpack.c.l.b16 %v1276
          %v1315 = vunpack.c.l.b16 %v1277
          %v1316 = vunpack.c.h.b16 %v1276
          %v1317 = vunpack.c.h.b16 %v1277
          %v1318 = vunpack.c.l.b16 %v1278
          %v1319 = vunpack.c.l.b16 %v1279
          %v1320 = vunpack.c.h.b16 %v1278
          %v1321 = vunpack.c.h.b16 %v1279
          %v1322 = vunpack.c.l.b16 %v1280
          %v1323 = vunpack.c.l.b16 %v1281
          %v1324 = vunpack.c.h.b16 %v1280
          %v1325 = vunpack.c.h.b16 %v1281
          %v1326 = vunpack.c.l.b16 %v1282
          %v1327 = vunpack.c.l.b16 %v1283
          %v1328 = vunpack.c.h.b16 %v1282
          %v1329 = vunpack.c.h.b16 %v1283
          %v1330 = vunpack.c.l.b16 %v1284
          %v1331 = vunpack.c.l.b16 %v1285
          %v1332 = vunpack.c.h.b16 %v1284
          %v1333 = vunpack.c.h.b16 %v1285
          %v1334 = vpack.c.b16 %v1303, %v1302
          %v1335 = vpack.c.b16 %v1305, %v1304
          %v1336 = vpack.c.b16 %v1307, %v1306
          %v1337 = vpack.c.b16 %v1309, %v1308
          %v1338 = vpack.c.b16 %v1311, %v1310
          %v1339 = vpack.c.b16 %v1313, %v1312
          %v1340 = vpack.c.b16 %v1315, %v1314
          %v1341 = vpack.c.b16 %v1317, %v1316
          %v1342 = vpack.c.b16 %v1319, %v1318
          %v1343 = vpack.c.b16 %v1321, %v1320
          %v1344 = vpack.c.b16 %v1323, %v1322
          %v1345 = vpack.c.b16 %v1325, %v1324
          %v1346 = vpack.c.b16 %v1327, %v1326
          %v1347 = vpack.c.b16 %v1329, %v1328
          %v1348 = vpack.c.b16 %v1331, %v1330
          %v1349 = vpack.c.b16 %v1333, %v1332
          %1366 = vst [vmem:[%s366] sm:$0xff] %v1334
          %1367 = vst [vmem:[%s366 + $0x8] sm:$0xff] %v1335
          %1368 = vst [vmem:[%s366 + $0x10] sm:$0xff] %v1336
          %1369 = vst [vmem:[%s366 + $0x18] sm:$0xff] %v1337
          %1370 = vst [vmem:[%s366 + $0x20] sm:$0xff] %v1338
          %1371 = vst [vmem:[%s366 + $0x28] sm:$0xff] %v1339
          %1372 = vst [vmem:[%s366 + $0x30] sm:$0xff] %v1340
          %1373 = vst [vmem:[%s366 + $0x38] sm:$0xff] %v1341
          %1374 = vst [vmem:[%s366 + $0x40] sm:$0xff] %v1342
          %1375 = vst [vmem:[%s366 + $0x48] sm:$0xff] %v1343
          %1376 = vst [vmem:[%s366 + $0x50] sm:$0xff] %v1344
          %1377 = vst [vmem:[%s366 + $0x58] sm:$0xff] %v1345
          %1378 = vst [vmem:[%s366 + $0x60] sm:$0xff] %v1346
          %1379 = vst [vmem:[%s366 + $0x68] sm:$0xff] %v1347
          %1380 = vst [vmem:[%s366 + $0x70] sm:$0xff] %v1348
          %1381 = vst [vmem:[%s366 + $0x78] sm:$0xff] %v1349
        $region68: #{tpu_custom_call.1} parent=43 // pred_fallthru
          _
        %p1382 = scmp.ge.s32.totalorder %s1041, 512
        // Predicated region
        $region69: #{tpu_custom_call.1} parent=43 // pred_check
          %p1383 = pneg %p1382
        $region70: #{tpu_custom_call.1} parent=43 // pred_check_branch
          %1385 = sbr.rel (%p1383) target = $region72
        $region71: #{tpu_custom_call.1} parent=43 // pred_region
          %v1386 = vpack.c.bf16 %v935, %v931
          %v1387 = vpack.c.bf16 %v937, %v933
          %v1388 = vpack.c.bf16 %v945, %v941
          %v1389 = vpack.c.bf16 %v947, %v943
          %v1390 = vpack.c.bf16 %v955, %v951
          %v1391 = vpack.c.bf16 %v957, %v953
          %v1392 = vpack.c.bf16 %v965, %v961
          %v1393 = vpack.c.bf16 %v967, %v963
          %v1394 = vpack.c.bf16 %v975, %v971
          %v1395 = vpack.c.bf16 %v977, %v973
          %v1396 = vpack.c.bf16 %v985, %v981
          %v1397 = vpack.c.bf16 %v987, %v983
          %v1398 = vpack.c.bf16 %v995, %v991
          %v1399 = vpack.c.bf16 %v997, %v993
          %v1400 = vpack.c.bf16 %v1005, %v1001
          %v1401 = vpack.c.bf16 %v1007, %v1003
          %v1418 = vunpack.c.l.b16 %v1386
          %v1419 = vunpack.c.l.b16 %v1387
          %v1420 = vunpack.c.h.b16 %v1386
          %v1421 = vunpack.c.h.b16 %v1387
          %v1422 = vunpack.c.l.b16 %v1388
          %v1423 = vunpack.c.l.b16 %v1389
          %v1424 = vunpack.c.h.b16 %v1388
          %v1425 = vunpack.c.h.b16 %v1389
          %v1426 = vunpack.c.l.b16 %v1390
          %v1427 = vunpack.c.l.b16 %v1391
          %v1428 = vunpack.c.h.b16 %v1390
          %v1429 = vunpack.c.h.b16 %v1391
          %v1430 = vunpack.c.l.b16 %v1392
          %v1431 = vunpack.c.l.b16 %v1393
          %v1432 = vunpack.c.h.b16 %v1392
          %v1433 = vunpack.c.h.b16 %v1393
          %v1434 = vunpack.c.l.b16 %v1394
          %v1435 = vunpack.c.l.b16 %v1395
          %v1436 = vunpack.c.h.b16 %v1394
          %v1437 = vunpack.c.h.b16 %v1395
          %v1438 = vunpack.c.l.b16 %v1396
          %v1439 = vunpack.c.l.b16 %v1397
          %v1440 = vunpack.c.h.b16 %v1396
          %v1441 = vunpack.c.h.b16 %v1397
          %v1442 = vunpack.c.l.b16 %v1398
          %v1443 = vunpack.c.l.b16 %v1399
          %v1444 = vunpack.c.h.b16 %v1398
          %v1445 = vunpack.c.h.b16 %v1399
          %v1446 = vunpack.c.l.b16 %v1400
          %v1447 = vunpack.c.l.b16 %v1401
          %v1448 = vunpack.c.h.b16 %v1400
          %v1449 = vunpack.c.h.b16 %v1401
          %v1450 = vpack.c.b16 %v1419, %v1418
          %v1451 = vpack.c.b16 %v1421, %v1420
          %v1452 = vpack.c.b16 %v1423, %v1422
          %v1453 = vpack.c.b16 %v1425, %v1424
          %v1454 = vpack.c.b16 %v1427, %v1426
          %v1455 = vpack.c.b16 %v1429, %v1428
          %v1456 = vpack.c.b16 %v1431, %v1430
          %v1457 = vpack.c.b16 %v1433, %v1432
          %v1458 = vpack.c.b16 %v1435, %v1434
          %v1459 = vpack.c.b16 %v1437, %v1436
          %v1460 = vpack.c.b16 %v1439, %v1438
          %v1461 = vpack.c.b16 %v1441, %v1440
          %v1462 = vpack.c.b16 %v1443, %v1442
          %v1463 = vpack.c.b16 %v1445, %v1444
          %v1464 = vpack.c.b16 %v1447, %v1446
          %v1465 = vpack.c.b16 %v1449, %v1448
          %1482 = vst [vmem:[%s366] sm:$0xff] %v1450
          %1483 = vst [vmem:[%s366 + $0x8] sm:$0xff] %v1451
          %1484 = vst [vmem:[%s366 + $0x10] sm:$0xff] %v1452
          %1485 = vst [vmem:[%s366 + $0x18] sm:$0xff] %v1453
          %1486 = vst [vmem:[%s366 + $0x20] sm:$0xff] %v1454
          %1487 = vst [vmem:[%s366 + $0x28] sm:$0xff] %v1455
          %1488 = vst [vmem:[%s366 + $0x30] sm:$0xff] %v1456
          %1489 = vst [vmem:[%s366 + $0x38] sm:$0xff] %v1457
          %1490 = vst [vmem:[%s366 + $0x40] sm:$0xff] %v1458
          %1491 = vst [vmem:[%s366 + $0x48] sm:$0xff] %v1459
          %1492 = vst [vmem:[%s366 + $0x50] sm:$0xff] %v1460
          %1493 = vst [vmem:[%s366 + $0x58] sm:$0xff] %v1461
          %1494 = vst [vmem:[%s366 + $0x60] sm:$0xff] %v1462
          %1495 = vst [vmem:[%s366 + $0x68] sm:$0xff] %v1463
          %1496 = vst [vmem:[%s366 + $0x70] sm:$0xff] %v1464
          %1497 = vst [vmem:[%s366 + $0x78] sm:$0xff] %v1465
        $region72: #{tpu_custom_call.1} parent=43 // pred_fallthru
          _
        %s1498 = sand.u32 %s198, 1
        %s1499 = scalar_lea.sflag [#allocation5], %s1498
        %s1500 = sand.u32 %s198, 1
        %s1501 = smul.addr %s1500, 128
        %s1502 = scalar_lea.vmem [#allocation11], %s1501
        // Predicated region
        $region73: #{tpu_custom_call.1} parent=43 // pred_check
          %p1503 = pneg %p208
        $region74: #{tpu_custom_call.1} parent=43 // pred_check_branch
          %1505 = sbr.rel (%p1503) target = $region76
        $region75: #{tpu_custom_call.1} parent=43 // pred_region
          %s1506 = smul.u32 16, %s29
          %s1507 = smul.u32 2, %s30
          %s1509 = ssub.s32 2048, 2048
          %1510 = vsyncadd %s1499, %s1509
          %s1511 = smul.addr %s1506, 6
          %s1512 = sadd.s32 %s1507, %s1511
          %s1513 = smul.addr %s1512, 64
          %s1514 = scalar_lea.hbm %s6, %s1513
          %s1515 = sshll.u32 %s1502, 4
          %s1516 = int_to_ptr.vmem [resolvable:$true] %s1515
          %1521 = dma.vmem_to_hbm [thread:$0]  %s1516, 2048, %s1514, %s1499, 128, 384, 8
        $region76: #{tpu_custom_call.1} parent=43 // pred_fallthru
          _
      $region44: #{tpu_custom_call.1} parent=5 // pred_fallthru
        _
      %p1522 = scmp.le.s32.totalorder 2, %s20
      // Predicated region
      $region77: #{tpu_custom_call.1} parent=5 // pred_check
        %p1523 = pneg %p1522
      $region78: #{tpu_custom_call.1} parent=5 // pred_check_branch
        %1525 = sbr.rel (%p1523) target = $region80
      $region79: #{tpu_custom_call.1} parent=5 // pred_region
        %s1526 = ssub.s32 %s20, 2
        // Predicated region
        $region81: #{tpu_custom_call.1} parent=79 // pred_check
          %p1527 = pneg %p214
        $region82: #{tpu_custom_call.1} parent=79 // pred_check_branch
          %1529 = sbr.rel (%p1527) target = $region84
        $region83: #{tpu_custom_call.1} parent=79 // pred_region
          %s1530 = sand.u32 %s199, 1
          %s1531 = scalar_lea.sflag [#allocation5], %s1530
          %s1532 = sand.u32 %s199, 1
          %s1533 = smul.addr %s1532, 128
          %s1534 = scalar_lea.vmem [#allocation11], %s1533
          %1535 = dma.done %s1531, 2048
        $region84: #{tpu_custom_call.1} parent=79 // pred_fallthru
          _
      $region80: #{tpu_custom_call.1} parent=5 // pred_fallthru
        _
    $region6: #{tpu_custom_call.1} parent=1 // loop_footer
      %s24 = sadd.s32 1, %s20
    $region7: #{tpu_custom_call.1} parent=1 // loop_footer_branch
      %19 = sbr.rel target = $region3
    $region8: #{tpu_custom_call.1} parent=1 // loop_exit
      _
    %1536 = vsyncpa [#allocation4], 1
    %s1537 = scalar_lea.sflag [#allocation4], 1
    %1538 = vsyncpa %s1537, 1
    %1539 = vsyncpa [#allocation7], 1
    %s1540 = scalar_lea.sflag [#allocation7], 1
    %1541 = vsyncpa %s1540, 1
    %1542 = vsyncpa [#allocation10], 1
    %1543 = vsyncpa [#allocation5], 1
    %s1544 = scalar_lea.sflag [#allocation5], 1
    %1545 = vsyncpa %s1544, 1

</llo_original>
